<compile_context>
chip_gen: v5e
topology: v5e:2x2
jax: 0.10.0
libtpu: 0.0.40
codegen_flags: <defaults>
</compile_context>

<pallas_src>
import jax
import jax.numpy as jnp
from jax.experimental import pallas as pl
from jax.experimental.pallas import tpu as pltpu


def decoder_layer_kernel(
    # activations
    tgt_ref, enc_ref,
    # masked (self) attention: fused qkv projection + bias + reduced output proj
    sa_wqkv, sa_bqkv, sa_wo,
    # cross attention: q projection, fused kv projection, reduced output proj
    ca_wq, ca_bq, ca_wkv, ca_bkv, ca_wo,
    # layer norms
    ln0_g, ln0_b, ln1_g, ln1_b, ln2_g, ln2_b,
    # feed-forward
    ff_w1, ff_w2,
    # output
    out_ref,
):
    f32 = jnp.float32
    bf16 = jnp.bfloat16

    tgt = tgt_ref[0]                      # (S, D) f32
    enc_b = enc_ref[0].astype(bf16)       # (S, D) bf16 (only used as matmul operand)
    S = tgt.shape[0]
    dh = sa_wo.shape[0]                   # per-head dim (wo_reduced is (dh, D))

    # Reproduce the reference fill pattern exactly: masked_fill where
    # tril(ones(S, S)) is truthy, i.e. row >= col, value -1e9.
    rows = jax.lax.broadcasted_iota(jnp.int32, (S, S), 0)
    cols = jax.lax.broadcasted_iota(jnp.int32, (S, S), 1)
    self_mask = rows >= cols

    def layernorm(x, gamma, beta, eps=1e-5):
        mean = jnp.mean(x, axis=-1, keepdims=True)
        diff = x - mean
        var = jnp.mean(diff * diff, axis=-1, keepdims=True)
        return diff * jax.lax.rsqrt(var + eps) * gamma + beta

    def softmax_attend(nq, nk, nv, mask):
        # 1/sqrt(dh) is already folded into the query projection in the wrapper.
        scores = jax.lax.dot_general(
            nq.astype(bf16), nk.astype(bf16),
            (((1,), (1,)), ((), ())),                      # contract last dims
            preferred_element_type=f32)                    # (S, S)
        if mask is not None:
            scores = jnp.where(mask, f32(-1000000000.0), scores)
        scores = scores - jnp.max(scores, axis=-1, keepdims=True)
        p = jnp.exp(scores)
        p = p * pl.reciprocal(jnp.sum(p, axis=-1, keepdims=True), approx=True)
        return jnp.dot(p.astype(bf16), nv.astype(bf16),
                       preferred_element_type=f32)          # (S, dh)

    # ---- masked self-attention + residual + LN0 ----
    tgt_b = tgt.astype(bf16)
    qkv = jnp.dot(tgt_b, sa_wqkv[...], preferred_element_type=f32) + sa_bqkv[...]
    head = softmax_attend(qkv[:, :dh], qkv[:, dh:2 * dh], qkv[:, 2 * dh:], self_mask)
    attn1 = jnp.dot(head.astype(bf16), sa_wo[...], preferred_element_type=f32)
    first = layernorm(attn1 + tgt, ln0_g[...], ln0_b[...])

    # ---- cross-attention (no mask) + residual + LN1 ----
    nq = jnp.dot(first.astype(bf16), ca_wq[...], preferred_element_type=f32) + ca_bq[...]
    kv = jnp.dot(enc_b, ca_wkv[...], preferred_element_type=f32) + ca_bkv[...]
    head2 = softmax_attend(nq, kv[:, :dh], kv[:, dh:], None)
    attn2 = jnp.dot(head2.astype(bf16), ca_wo[...], preferred_element_type=f32)
    second = layernorm(attn2 + first, ln1_g[...], ln1_b[...])

    # ---- feed-forward (Linear -> ReLU -> Linear, no bias) + residual + LN2 ----
    h = jnp.maximum(
        jnp.dot(second.astype(bf16), ff_w1[...], preferred_element_type=f32), 0.0)
    ff = jnp.dot(h.astype(bf16), ff_w2[...], preferred_element_type=f32)
    out_ref[0] = layernorm(ff + second, ln2_g[...], ln2_b[...]).astype(out_ref.dtype)


def decoder_layer(target, enc_output, params):
    B, S, D = target.shape

    act_spec = pl.BlockSpec((1, S, D), lambda b: (b, 0, 0))

    def w_spec(arr):
        nd = arr.ndim
        # Constant block index across the grid -> weight stays resident in VMEM.
        return pl.BlockSpec(arr.shape, lambda b, _nd=nd: (0,) * _nd)

    operands = [target, enc_output] + list(params)
    in_specs = [act_spec, act_spec] + [w_spec(p) for p in params]

    return pl.pallas_call(
        decoder_layer_kernel,
        out_shape=jax.ShapeDtypeStruct((B, S, D), jnp.float32),
        grid_spec=pltpu.PrefetchScalarGridSpec(
            num_scalar_prefetch=0,
            grid=(B,),
            in_specs=in_specs,
            out_specs=pl.BlockSpec((1, S, D), lambda b: (b, 0, 0)),
        ),
        compiler_params=pltpu.CompilerParams(
            dimension_semantics=("parallel",),   # batch axis: megacore-shardable
            vmem_limit_bytes=64 * 1024 * 1024,
        ),
    )(*operands)


def init_raw_params(key, num_heads, input_dim, middle_dim):
    """PyTorch-equivalent weights, stored pre-transposed as (in_features, out_features)."""
    dh = input_dim // num_heads
    keys = iter(jax.random.split(key, 32))

    def lin(in_f, out_f, scale=0.05):
        return jax.random.normal(next(keys), (in_f, out_f), jnp.float32) * scale

    def bias(n, scale=0.05):
        return jax.random.normal(next(keys), (n,), jnp.float32) * scale

    def mha():
        return dict(
            wq=lin(input_dim, input_dim),
            wk=lin(input_dim, input_dim),
            wv=lin(input_dim, input_dim),
            wmq=lin(input_dim, dh), bmq=bias(dh),
            wmk=lin(input_dim, dh), bmk=bias(dh),
            wmv=lin(input_dim, dh), bmv=bias(dh),
            wo=lin(input_dim, input_dim),
        )

    return dict(
        masked=mha(),
        cross=mha(),
        ln=[(jnp.ones((input_dim,), jnp.float32),
             jnp.zeros((input_dim,), jnp.float32)) for _ in range(3)],
        ff_w1=lin(input_dim, middle_dim),
        ff_w2=lin(middle_dim, input_dim),
    )


def fold_params(raw, num_heads, input_dim):
    """Fold the reference module's weights into the compact kernel operands."""
    bf16 = jnp.bfloat16
    dh = input_dim // num_heads
    scale = 1.0 / (dh ** 0.5)

    def fold_mha(m, fuse_q):
        # Chained projections fold: x @ wq @ wmq == x @ (wq @ wmq); the attention
        # scale 1/sqrt(dh) is folded into the query path (weights + bias).
        wqm = (m["wq"] @ m["wmq"]) * scale
        bq = m["bmq"] * scale
        wkm = m["wk"] @ m["wmk"]
        wvm = m["wv"] @ m["wmv"]
        # All H heads are identical in the reference, so
        # concat([head] * H) @ wo == head @ sum-of-row-blocks(wo).
        wo_red = m["wo"].reshape(num_heads, dh, input_dim).sum(0)       # (dh, D)
        if fuse_q:
            wqkv = jnp.concatenate([wqm, wkm, wvm], axis=1).astype(bf16)  # (D, 3*dh)
            bqkv = jnp.concatenate([bq, m["bmk"], m["bmv"]])[None, :]     # (1, 3*dh)
            return [wqkv, bqkv, wo_red.astype(bf16)]
        wkv = jnp.concatenate([wkm, wvm], axis=1).astype(bf16)            # (D, 2*dh)
        bkv = jnp.concatenate([m["bmk"], m["bmv"]])[None, :]              # (1, 2*dh)
        return [wqm.astype(bf16), bq[None, :], wkv, bkv, wo_red.astype(bf16)]

    params = []
    params += fold_mha(raw["masked"], fuse_q=True)    # self-attn: q/k/v share input
    params += fold_mha(raw["cross"], fuse_q=False)    # cross-attn: q input differs
    for g, b in raw["ln"]:
        params += [g[None, :], b[None, :]]
    params += [raw["ff_w1"].astype(bf16), raw["ff_w2"].astype(bf16)]
    return params


if __name__ == "__main__":
    B, S, D = 2, 8, 32
    NUM_HEADS = 4
    MIDDLE = 64

    key = jax.random.PRNGKey(0)
    k_tgt, k_enc, k_par = jax.random.split(key, 3)

    target = jax.random.normal(k_tgt, (B, S, D), jnp.float32)
    enc_output = jax.random.normal(k_enc, (B, S, D), jnp.float32)

    raw = init_raw_params(k_par, NUM_HEADS, D, MIDDLE)
    params = fold_params(raw, NUM_HEADS, D)

    out = decoder_layer(target, enc_output, params)
    out = jax.block_until_ready(out)

    assert out.shape == (B, S, D) and out.dtype == jnp.float32
    assert bool(jnp.all(jnp.isfinite(out)))
    print("KERNEL_OK")
</pallas_src>

<mosaic_0001>
module attributes {stable_mosaic.version = 11 : i64} {
  func.func @decoder_layer_kernel(%arg0: i32, %arg1: memref<1x8x32xf32, #tpu.memory_space<vmem>>, %arg2: memref<1x8x32xf32, #tpu.memory_space<vmem>>, %arg3: memref<32x24xbf16, #tpu.memory_space<vmem>>, %arg4: memref<1x24xf32, #tpu.memory_space<vmem>>, %arg5: memref<8x32xbf16, #tpu.memory_space<vmem>>, %arg6: memref<32x8xbf16, #tpu.memory_space<vmem>>, %arg7: memref<1x8xf32, #tpu.memory_space<vmem>>, %arg8: memref<32x16xbf16, #tpu.memory_space<vmem>>, %arg9: memref<1x16xf32, #tpu.memory_space<vmem>>, %arg10: memref<8x32xbf16, #tpu.memory_space<vmem>>, %arg11: memref<1x32xf32, #tpu.memory_space<vmem>>, %arg12: memref<1x32xf32, #tpu.memory_space<vmem>>, %arg13: memref<1x32xf32, #tpu.memory_space<vmem>>, %arg14: memref<1x32xf32, #tpu.memory_space<vmem>>, %arg15: memref<1x32xf32, #tpu.memory_space<vmem>>, %arg16: memref<1x32xf32, #tpu.memory_space<vmem>>, %arg17: memref<32x64xbf16, #tpu.memory_space<vmem>>, %arg18: memref<64x32xbf16, #tpu.memory_space<vmem>>, %arg19: memref<1x8x32xf32, #tpu.memory_space<vmem>>) attributes {dimension_semantics = [#tpu.dimension_semantics<parallel>], iteration_bounds = array<i64: 2>, scalar_prefetch = 0 : i64, scratch_operands = 0 : i64, tpu.core_type = #tpu.core_type<tc>, window_params = [{transform_indices = @transform_0, window_bounds = array<i64: 1, 8, 32>}, {transform_indices = @transform_1, window_bounds = array<i64: 1, 8, 32>}, {pipeline_mode = #tpu.pipeline_mode<synchronous>, transform_indices = @transform_2, window_bounds = array<i64: 32, 24>}, {pipeline_mode = #tpu.pipeline_mode<synchronous>, transform_indices = @transform_3, window_bounds = array<i64: 1, 24>}, {pipeline_mode = #tpu.pipeline_mode<synchronous>, transform_indices = @transform_4, window_bounds = array<i64: 8, 32>}, {pipeline_mode = #tpu.pipeline_mode<synchronous>, transform_indices = @transform_5, window_bounds = array<i64: 32, 8>}, {pipeline_mode = #tpu.pipeline_mode<synchronous>, transform_indices = @transform_6, window_bounds = array<i64: 1, 8>}, {pipeline_mode = #tpu.pipeline_mode<synchronous>, transform_indices = @transform_7, window_bounds = array<i64: 32, 16>}, {pipeline_mode = #tpu.pipeline_mode<synchronous>, transform_indices = @transform_8, window_bounds = array<i64: 1, 16>}, {pipeline_mode = #tpu.pipeline_mode<synchronous>, transform_indices = @transform_9, window_bounds = array<i64: 8, 32>}, {pipeline_mode = #tpu.pipeline_mode<synchronous>, transform_indices = @transform_10, window_bounds = array<i64: 1, 32>}, {pipeline_mode = #tpu.pipeline_mode<synchronous>, transform_indices = @transform_11, window_bounds = array<i64: 1, 32>}, {pipeline_mode = #tpu.pipeline_mode<synchronous>, transform_indices = @transform_12, window_bounds = array<i64: 1, 32>}, {pipeline_mode = #tpu.pipeline_mode<synchronous>, transform_indices = @transform_13, window_bounds = array<i64: 1, 32>}, {pipeline_mode = #tpu.pipeline_mode<synchronous>, transform_indices = @transform_14, window_bounds = array<i64: 1, 32>}, {pipeline_mode = #tpu.pipeline_mode<synchronous>, transform_indices = @transform_15, window_bounds = array<i64: 1, 32>}, {pipeline_mode = #tpu.pipeline_mode<synchronous>, transform_indices = @transform_16, window_bounds = array<i64: 32, 64>}, {pipeline_mode = #tpu.pipeline_mode<synchronous>, transform_indices = @transform_17, window_bounds = array<i64: 64, 32>}, {transform_indices = @transform_18, window_bounds = array<i64: 1, 8, 32>}]} {
    %c0 = arith.constant 0 : index
    %c0_0 = arith.constant 0 : index
    %c0_1 = arith.constant 0 : index
    %0 = vector.load %arg1[%c0, %c0_0, %c0_1] : memref<1x8x32xf32, #tpu.memory_space<vmem>>, vector<1x8x32xf32>
    %1 = vector.shape_cast %0 : vector<1x8x32xf32> to vector<8x32xf32>
    %c0_2 = arith.constant 0 : index
    %c0_3 = arith.constant 0 : index
    %c0_4 = arith.constant 0 : index
    %2 = vector.load %arg2[%c0_2, %c0_3, %c0_4] : memref<1x8x32xf32, #tpu.memory_space<vmem>>, vector<1x8x32xf32>
    %3 = vector.shape_cast %2 : vector<1x8x32xf32> to vector<8x32xf32>
    %4 = arith.truncf %3 : vector<8x32xf32> to vector<8x32xbf16>
    %5 = tpu.iota {dimensions = array<i32: 0>} : vector<8x8xi32>
    %6 = tpu.iota {dimensions = array<i32: 1>} : vector<8x8xi32>
    %7 = arith.cmpi sge, %5, %6 : vector<8x8xi32>
    %8 = arith.truncf %1 : vector<8x32xf32> to vector<8x32xbf16>
    %c0_5 = arith.constant 0 : index
    %c0_6 = arith.constant 0 : index
    %9 = vector.load %arg3[%c0_5, %c0_6] : memref<32x24xbf16, #tpu.memory_space<vmem>>, vector<32x24xbf16>
    %cst = arith.constant dense<0.000000e+00> : vector<8x24xf32>
    %10 = tpu.matmul %8, %9, %cst {dimension_numbers = #tpu.dot_dimension_numbers<[1], [0], [0], [1], [0, 0, 1, 1], [], []>} : vector<8x32xbf16>, vector<32x24xbf16>, vector<8x24xf32> -> vector<8x24xf32>
    %c0_7 = arith.constant 0 : index
    %c0_8 = arith.constant 0 : index
    %11 = vector.load %arg4[%c0_7, %c0_8] : memref<1x24xf32, #tpu.memory_space<vmem>>, vector<1x24xf32>
    %12 = vector.broadcast %11 : vector<1x24xf32> to vector<8x24xf32>
    %13 = arith.addf %10, %12 : vector<8x24xf32>
    %14 = vector.extract_strided_slice %13 {offsets = [0, 0], sizes = [8, 8], strides = [1, 1]} : vector<8x24xf32> to vector<8x8xf32>
    %15 = vector.extract_strided_slice %13 {offsets = [0, 8], sizes = [8, 8], strides = [1, 1]} : vector<8x24xf32> to vector<8x8xf32>
    %16 = vector.extract_strided_slice %13 {offsets = [0, 16], sizes = [8, 8], strides = [1, 1]} : vector<8x24xf32> to vector<8x8xf32>
    %17 = arith.truncf %14 : vector<8x8xf32> to vector<8x8xbf16>
    %18 = arith.truncf %15 : vector<8x8xf32> to vector<8x8xbf16>
    %cst_9 = arith.constant dense<0.000000e+00> : vector<8x8xf32>
    %19 = tpu.matmul %17, %18, %cst_9 {dimension_numbers = #tpu.dot_dimension_numbers<[1], [1], [0], [0], [0, 0, 1, 0], [], []>} : vector<8x8xbf16>, vector<8x8xbf16>, vector<8x8xf32> -> vector<8x8xf32>
    %cst_10 = arith.constant -1.000000e+09 : f32
    %20 = vector.broadcast %cst_10 : f32 to vector<8x8xf32>
    %21 = arith.select %7, %20, %19 : vector<8x8xi1>, vector<8x8xf32>
    %cst_11 = arith.constant dense<0xFF800000> : vector<8xf32>
    %22 = vector.multi_reduction <maximumf>, %21, %cst_11 [1] : vector<8x8xf32> to vector<8xf32>
    %23 = vector.shape_cast %22 : vector<8xf32> to vector<8x1xf32>
    %24 = vector.broadcast %23 : vector<8x1xf32> to vector<8x8xf32>
    %25 = arith.subf %21, %24 : vector<8x8xf32>
    %26 = math.exp %25 : vector<8x8xf32>
    %cst_12 = arith.constant dense<0.000000e+00> : vector<8xf32>
    %27 = vector.multi_reduction <add>, %26, %cst_12 [1] : vector<8x8xf32> to vector<8xf32>
    %28 = vector.shape_cast %27 : vector<8xf32> to vector<8x1xf32>
    %29 = tpu.reciprocal %28 {approx = true} : vector<8x1xf32> -> vector<8x1xf32>
    %30 = vector.broadcast %29 : vector<8x1xf32> to vector<8x8xf32>
    %31 = arith.mulf %26, %30 : vector<8x8xf32>
    %32 = arith.truncf %31 : vector<8x8xf32> to vector<8x8xbf16>
    %33 = arith.truncf %16 : vector<8x8xf32> to vector<8x8xbf16>
    %cst_13 = arith.constant dense<0.000000e+00> : vector<8x8xf32>
    %34 = tpu.matmul %32, %33, %cst_13 {dimension_numbers = #tpu.dot_dimension_numbers<[1], [0], [0], [1], [0, 0, 1, 1], [], []>} : vector<8x8xbf16>, vector<8x8xbf16>, vector<8x8xf32> -> vector<8x8xf32>
    %35 = arith.truncf %34 : vector<8x8xf32> to vector<8x8xbf16>
    %c0_14 = arith.constant 0 : index
    %c0_15 = arith.constant 0 : index
    %36 = vector.load %arg5[%c0_14, %c0_15] : memref<8x32xbf16, #tpu.memory_space<vmem>>, vector<8x32xbf16>
    %cst_16 = arith.constant dense<0.000000e+00> : vector<8x32xf32>
    %37 = tpu.matmul %35, %36, %cst_16 {dimension_numbers = #tpu.dot_dimension_numbers<[1], [0], [0], [1], [0, 0, 1, 1], [], []>} : vector<8x8xbf16>, vector<8x32xbf16>, vector<8x32xf32> -> vector<8x32xf32>
    %38 = arith.addf %37, %1 : vector<8x32xf32>
    %c0_17 = arith.constant 0 : index
    %c0_18 = arith.constant 0 : index
    %39 = vector.load %arg11[%c0_17, %c0_18] : memref<1x32xf32, #tpu.memory_space<vmem>>, vector<1x32xf32>
    %c0_19 = arith.constant 0 : index
    %c0_20 = arith.constant 0 : index
    %40 = vector.load %arg12[%c0_19, %c0_20] : memref<1x32xf32, #tpu.memory_space<vmem>>, vector<1x32xf32>
    %cst_21 = arith.constant dense<0.000000e+00> : vector<8xf32>
    %41 = vector.multi_reduction <add>, %38, %cst_21 [1] : vector<8x32xf32> to vector<8xf32>
    %42 = vector.shape_cast %41 : vector<8xf32> to vector<8x1xf32>
    %cst_22 = arith.constant 3.200000e+01 : f32
    %43 = vector.broadcast %cst_22 : f32 to vector<8x1xf32>
    %44 = arith.divf %42, %43 : vector<8x1xf32>
    %45 = vector.broadcast %44 : vector<8x1xf32> to vector<8x32xf32>
    %46 = arith.subf %38, %45 : vector<8x32xf32>
    %47 = arith.mulf %46, %46 : vector<8x32xf32>
    %cst_23 = arith.constant dense<0.000000e+00> : vector<8xf32>
    %48 = vector.multi_reduction <add>, %47, %cst_23 [1] : vector<8x32xf32> to vector<8xf32>
    %49 = vector.shape_cast %48 : vector<8xf32> to vector<8x1xf32>
    %cst_24 = arith.constant 3.200000e+01 : f32
    %50 = vector.broadcast %cst_24 : f32 to vector<8x1xf32>
    %51 = arith.divf %49, %50 : vector<8x1xf32>
    %cst_25 = arith.constant 9.99999974E-6 : f32
    %52 = vector.broadcast %cst_25 : f32 to vector<8x1xf32>
    %53 = arith.addf %51, %52 : vector<8x1xf32>
    %54 = math.rsqrt %53 : vector<8x1xf32>
    %55 = vector.broadcast %54 : vector<8x1xf32> to vector<8x32xf32>
    %56 = arith.mulf %46, %55 : vector<8x32xf32>
    %57 = vector.broadcast %39 : vector<1x32xf32> to vector<8x32xf32>
    %58 = arith.mulf %56, %57 : vector<8x32xf32>
    %59 = vector.broadcast %40 : vector<1x32xf32> to vector<8x32xf32>
    %60 = arith.addf %58, %59 : vector<8x32xf32>
    %61 = arith.truncf %60 : vector<8x32xf32> to vector<8x32xbf16>
    %c0_26 = arith.constant 0 : index
    %c0_27 = arith.constant 0 : index
    %62 = vector.load %arg6[%c0_26, %c0_27] : memref<32x8xbf16, #tpu.memory_space<vmem>>, vector<32x8xbf16>
    %cst_28 = arith.constant dense<0.000000e+00> : vector<8x8xf32>
    %63 = tpu.matmul %61, %62, %cst_28 {dimension_numbers = #tpu.dot_dimension_numbers<[1], [0], [0], [1], [0, 0, 1, 1], [], []>} : vector<8x32xbf16>, vector<32x8xbf16>, vector<8x8xf32> -> vector<8x8xf32>
    %c0_29 = arith.constant 0 : index
    %c0_30 = arith.constant 0 : index
    %64 = vector.load %arg7[%c0_29, %c0_30] : memref<1x8xf32, #tpu.memory_space<vmem>>, vector<1x8xf32>
    %65 = vector.broadcast %64 : vector<1x8xf32> to vector<8x8xf32>
    %66 = arith.addf %63, %65 : vector<8x8xf32>
    %c0_31 = arith.constant 0 : index
    %c0_32 = arith.constant 0 : index
    %67 = vector.load %arg8[%c0_31, %c0_32] : memref<32x16xbf16, #tpu.memory_space<vmem>>, vector<32x16xbf16>
    %cst_33 = arith.constant dense<0.000000e+00> : vector<8x16xf32>
    %68 = tpu.matmul %4, %67, %cst_33 {dimension_numbers = #tpu.dot_dimension_numbers<[1], [0], [0], [1], [0, 0, 1, 1], [], []>} : vector<8x32xbf16>, vector<32x16xbf16>, vector<8x16xf32> -> vector<8x16xf32>
    %c0_34 = arith.constant 0 : index
    %c0_35 = arith.constant 0 : index
    %69 = vector.load %arg9[%c0_34, %c0_35] : memref<1x16xf32, #tpu.memory_space<vmem>>, vector<1x16xf32>
    %70 = vector.broadcast %69 : vector<1x16xf32> to vector<8x16xf32>
    %71 = arith.addf %68, %70 : vector<8x16xf32>
    %72 = vector.extract_strided_slice %71 {offsets = [0, 0], sizes = [8, 8], strides = [1, 1]} : vector<8x16xf32> to vector<8x8xf32>
    %73 = vector.extract_strided_slice %71 {offsets = [0, 8], sizes = [8, 8], strides = [1, 1]} : vector<8x16xf32> to vector<8x8xf32>
    %74 = arith.truncf %66 : vector<8x8xf32> to vector<8x8xbf16>
    %75 = arith.truncf %72 : vector<8x8xf32> to vector<8x8xbf16>
    %cst_36 = arith.constant dense<0.000000e+00> : vector<8x8xf32>
    %76 = tpu.matmul %74, %75, %cst_36 {dimension_numbers = #tpu.dot_dimension_numbers<[1], [1], [0], [0], [0, 0, 1, 0], [], []>} : vector<8x8xbf16>, vector<8x8xbf16>, vector<8x8xf32> -> vector<8x8xf32>
    %cst_37 = arith.constant dense<0xFF800000> : vector<8xf32>
    %77 = vector.multi_reduction <maximumf>, %76, %cst_37 [1] : vector<8x8xf32> to vector<8xf32>
    %78 = vector.shape_cast %77 : vector<8xf32> to vector<8x1xf32>
    %79 = vector.broadcast %78 : vector<8x1xf32> to vector<8x8xf32>
    %80 = arith.subf %76, %79 : vector<8x8xf32>
    %81 = math.exp %80 : vector<8x8xf32>
    %cst_38 = arith.constant dense<0.000000e+00> : vector<8xf32>
    %82 = vector.multi_reduction <add>, %81, %cst_38 [1] : vector<8x8xf32> to vector<8xf32>
    %83 = vector.shape_cast %82 : vector<8xf32> to vector<8x1xf32>
    %84 = tpu.reciprocal %83 {approx = true} : vector<8x1xf32> -> vector<8x1xf32>
    %85 = vector.broadcast %84 : vector<8x1xf32> to vector<8x8xf32>
    %86 = arith.mulf %81, %85 : vector<8x8xf32>
    %87 = arith.truncf %86 : vector<8x8xf32> to vector<8x8xbf16>
    %88 = arith.truncf %73 : vector<8x8xf32> to vector<8x8xbf16>
    %cst_39 = arith.constant dense<0.000000e+00> : vector<8x8xf32>
    %89 = tpu.matmul %87, %88, %cst_39 {dimension_numbers = #tpu.dot_dimension_numbers<[1], [0], [0], [1], [0, 0, 1, 1], [], []>} : vector<8x8xbf16>, vector<8x8xbf16>, vector<8x8xf32> -> vector<8x8xf32>
    %90 = arith.truncf %89 : vector<8x8xf32> to vector<8x8xbf16>
    %c0_40 = arith.constant 0 : index
    %c0_41 = arith.constant 0 : index
    %91 = vector.load %arg10[%c0_40, %c0_41] : memref<8x32xbf16, #tpu.memory_space<vmem>>, vector<8x32xbf16>
    %cst_42 = arith.constant dense<0.000000e+00> : vector<8x32xf32>
    %92 = tpu.matmul %90, %91, %cst_42 {dimension_numbers = #tpu.dot_dimension_numbers<[1], [0], [0], [1], [0, 0, 1, 1], [], []>} : vector<8x8xbf16>, vector<8x32xbf16>, vector<8x32xf32> -> vector<8x32xf32>
    %93 = arith.addf %92, %60 : vector<8x32xf32>
    %c0_43 = arith.constant 0 : index
    %c0_44 = arith.constant 0 : index
    %94 = vector.load %arg13[%c0_43, %c0_44] : memref<1x32xf32, #tpu.memory_space<vmem>>, vector<1x32xf32>
    %c0_45 = arith.constant 0 : index
    %c0_46 = arith.constant 0 : index
    %95 = vector.load %arg14[%c0_45, %c0_46] : memref<1x32xf32, #tpu.memory_space<vmem>>, vector<1x32xf32>
    %cst_47 = arith.constant dense<0.000000e+00> : vector<8xf32>
    %96 = vector.multi_reduction <add>, %93, %cst_47 [1] : vector<8x32xf32> to vector<8xf32>
    %97 = vector.shape_cast %96 : vector<8xf32> to vector<8x1xf32>
    %cst_48 = arith.constant 3.200000e+01 : f32
    %98 = vector.broadcast %cst_48 : f32 to vector<8x1xf32>
    %99 = arith.divf %97, %98 : vector<8x1xf32>
    %100 = vector.broadcast %99 : vector<8x1xf32> to vector<8x32xf32>
    %101 = arith.subf %93, %100 : vector<8x32xf32>
    %102 = arith.mulf %101, %101 : vector<8x32xf32>
    %cst_49 = arith.constant dense<0.000000e+00> : vector<8xf32>
    %103 = vector.multi_reduction <add>, %102, %cst_49 [1] : vector<8x32xf32> to vector<8xf32>
    %104 = vector.shape_cast %103 : vector<8xf32> to vector<8x1xf32>
    %cst_50 = arith.constant 3.200000e+01 : f32
    %105 = vector.broadcast %cst_50 : f32 to vector<8x1xf32>
    %106 = arith.divf %104, %105 : vector<8x1xf32>
    %cst_51 = arith.constant 9.99999974E-6 : f32
    %107 = vector.broadcast %cst_51 : f32 to vector<8x1xf32>
    %108 = arith.addf %106, %107 : vector<8x1xf32>
    %109 = math.rsqrt %108 : vector<8x1xf32>
    %110 = vector.broadcast %109 : vector<8x1xf32> to vector<8x32xf32>
    %111 = arith.mulf %101, %110 : vector<8x32xf32>
    %112 = vector.broadcast %94 : vector<1x32xf32> to vector<8x32xf32>
    %113 = arith.mulf %111, %112 : vector<8x32xf32>
    %114 = vector.broadcast %95 : vector<1x32xf32> to vector<8x32xf32>
    %115 = arith.addf %113, %114 : vector<8x32xf32>
    %116 = arith.truncf %115 : vector<8x32xf32> to vector<8x32xbf16>
    %c0_52 = arith.constant 0 : index
    %c0_53 = arith.constant 0 : index
    %117 = vector.load %arg17[%c0_52, %c0_53] : memref<32x64xbf16, #tpu.memory_space<vmem>>, vector<32x64xbf16>
    %cst_54 = arith.constant dense<0.000000e+00> : vector<8x64xf32>
    %118 = tpu.matmul %116, %117, %cst_54 {dimension_numbers = #tpu.dot_dimension_numbers<[1], [0], [0], [1], [0, 0, 1, 1], [], []>} : vector<8x32xbf16>, vector<32x64xbf16>, vector<8x64xf32> -> vector<8x64xf32>
    %cst_55 = arith.constant 0.000000e+00 : f32
    %119 = vector.broadcast %cst_55 : f32 to vector<8x64xf32>
    %120 = arith.maximumf %118, %119 : vector<8x64xf32>
    %121 = arith.truncf %120 : vector<8x64xf32> to vector<8x64xbf16>
    %c0_56 = arith.constant 0 : index
    %c0_57 = arith.constant 0 : index
    %122 = vector.load %arg18[%c0_56, %c0_57] : memref<64x32xbf16, #tpu.memory_space<vmem>>, vector<64x32xbf16>
    %cst_58 = arith.constant dense<0.000000e+00> : vector<8x32xf32>
    %123 = tpu.matmul %121, %122, %cst_58 {dimension_numbers = #tpu.dot_dimension_numbers<[1], [0], [0], [1], [0, 0, 1, 1], [], []>} : vector<8x64xbf16>, vector<64x32xbf16>, vector<8x32xf32> -> vector<8x32xf32>
    %124 = arith.addf %123, %115 : vector<8x32xf32>
    %c0_59 = arith.constant 0 : index
    %c0_60 = arith.constant 0 : index
    %125 = vector.load %arg15[%c0_59, %c0_60] : memref<1x32xf32, #tpu.memory_space<vmem>>, vector<1x32xf32>
    %c0_61 = arith.constant 0 : index
    %c0_62 = arith.constant 0 : index
    %126 = vector.load %arg16[%c0_61, %c0_62] : memref<1x32xf32, #tpu.memory_space<vmem>>, vector<1x32xf32>
    %cst_63 = arith.constant dense<0.000000e+00> : vector<8xf32>
    %127 = vector.multi_reduction <add>, %124, %cst_63 [1] : vector<8x32xf32> to vector<8xf32>
    %128 = vector.shape_cast %127 : vector<8xf32> to vector<8x1xf32>
    %cst_64 = arith.constant 3.200000e+01 : f32
    %129 = vector.broadcast %cst_64 : f32 to vector<8x1xf32>
    %130 = arith.divf %128, %129 : vector<8x1xf32>
    %131 = vector.broadcast %130 : vector<8x1xf32> to vector<8x32xf32>
    %132 = arith.subf %124, %131 : vector<8x32xf32>
    %133 = arith.mulf %132, %132 : vector<8x32xf32>
    %cst_65 = arith.constant dense<0.000000e+00> : vector<8xf32>
    %134 = vector.multi_reduction <add>, %133, %cst_65 [1] : vector<8x32xf32> to vector<8xf32>
    %135 = vector.shape_cast %134 : vector<8xf32> to vector<8x1xf32>
    %cst_66 = arith.constant 3.200000e+01 : f32
    %136 = vector.broadcast %cst_66 : f32 to vector<8x1xf32>
    %137 = arith.divf %135, %136 : vector<8x1xf32>
    %cst_67 = arith.constant 9.99999974E-6 : f32
    %138 = vector.broadcast %cst_67 : f32 to vector<8x1xf32>
    %139 = arith.addf %137, %138 : vector<8x1xf32>
    %140 = math.rsqrt %139 : vector<8x1xf32>
    %141 = vector.broadcast %140 : vector<8x1xf32> to vector<8x32xf32>
    %142 = arith.mulf %132, %141 : vector<8x32xf32>
    %143 = vector.broadcast %125 : vector<1x32xf32> to vector<8x32xf32>
    %144 = arith.mulf %142, %143 : vector<8x32xf32>
    %145 = vector.broadcast %126 : vector<1x32xf32> to vector<8x32xf32>
    %146 = arith.addf %144, %145 : vector<8x32xf32>
    %c0_68 = arith.constant 0 : index
    %c0_69 = arith.constant 0 : index
    %c0_70 = arith.constant 0 : index
    %147 = vector.load %arg19[%c0_68, %c0_69, %c0_70] : memref<1x8x32xf32, #tpu.memory_space<vmem>>, vector<1x8x32xf32>
    %148 = vector.shape_cast %147 : vector<1x8x32xf32> to vector<8x32xf32>
    %149 = vector.shape_cast %146 : vector<8x32xf32> to vector<1x8x32xf32>
    tpu.vector_store %arg19[%c0_68, %c0_69, %c0_70], %149 {strides = array<i32>} : memref<1x8x32xf32, #tpu.memory_space<vmem>>, vector<1x8x32xf32>,
    return
  }
  func.func @transform_0(%arg0: i32) -> (i32, i32, i32) {
    %c0_i32 = arith.constant 0 : i32
    %c0_i32_0 = arith.constant 0 : i32
    %c0_i32_1 = arith.constant 0 : i32
    return %arg0, %c0_i32, %c0_i32_0 : i32, i32, i32
  }
  func.func @transform_1(%arg0: i32) -> (i32, i32, i32) {
    %c0_i32 = arith.constant 0 : i32
    %c0_i32_0 = arith.constant 0 : i32
    %c0_i32_1 = arith.constant 0 : i32
    return %arg0, %c0_i32, %c0_i32_0 : i32, i32, i32
  }
  func.func @transform_2(%arg0: i32) -> (i32, i32) {
    %c0_i32 = arith.constant 0 : i32
    %c0_i32_0 = arith.constant 0 : i32
    %c0_i32_1 = arith.constant 0 : i32
    return %c0_i32, %c0_i32_0 : i32, i32
  }
  func.func @transform_3(%arg0: i32) -> (i32, i32) {
    %c0_i32 = arith.constant 0 : i32
    %c0_i32_0 = arith.constant 0 : i32
    %c0_i32_1 = arith.constant 0 : i32
    return %c0_i32, %c0_i32_0 : i32, i32
  }
  func.func @transform_4(%arg0: i32) -> (i32, i32) {
    %c0_i32 = arith.constant 0 : i32
    %c0_i32_0 = arith.constant 0 : i32
    %c0_i32_1 = arith.constant 0 : i32
    return %c0_i32, %c0_i32_0 : i32, i32
  }
  func.func @transform_5(%arg0: i32) -> (i32, i32) {
    %c0_i32 = arith.constant 0 : i32
    %c0_i32_0 = arith.constant 0 : i32
    %c0_i32_1 = arith.constant 0 : i32
    return %c0_i32, %c0_i32_0 : i32, i32
  }
  func.func @transform_6(%arg0: i32) -> (i32, i32) {
    %c0_i32 = arith.constant 0 : i32
    %c0_i32_0 = arith.constant 0 : i32
    %c0_i32_1 = arith.constant 0 : i32
    return %c0_i32, %c0_i32_0 : i32, i32
  }
  func.func @transform_7(%arg0: i32) -> (i32, i32) {
    %c0_i32 = arith.constant 0 : i32
    %c0_i32_0 = arith.constant 0 : i32
    %c0_i32_1 = arith.constant 0 : i32
    return %c0_i32, %c0_i32_0 : i32, i32
  }
  func.func @transform_8(%arg0: i32) -> (i32, i32) {
    %c0_i32 = arith.constant 0 : i32
    %c0_i32_0 = arith.constant 0 : i32
    %c0_i32_1 = arith.constant 0 : i32
    return %c0_i32, %c0_i32_0 : i32, i32
  }
  func.func @transform_9(%arg0: i32) -> (i32, i32) {
    %c0_i32 = arith.constant 0 : i32
    %c0_i32_0 = arith.constant 0 : i32
    %c0_i32_1 = arith.constant 0 : i32
    return %c0_i32, %c0_i32_0 : i32, i32
  }
  func.func @transform_10(%arg0: i32) -> (i32, i32) {
    %c0_i32 = arith.constant 0 : i32
    %c0_i32_0 = arith.constant 0 : i32
    %c0_i32_1 = arith.constant 0 : i32
    return %c0_i32, %c0_i32_0 : i32, i32
  }
  func.func @transform_11(%arg0: i32) -> (i32, i32) {
    %c0_i32 = arith.constant 0 : i32
    %c0_i32_0 = arith.constant 0 : i32
    %c0_i32_1 = arith.constant 0 : i32
    return %c0_i32, %c0_i32_0 : i32, i32
  }
  func.func @transform_12(%arg0: i32) -> (i32, i32) {
    %c0_i32 = arith.constant 0 : i32
    %c0_i32_0 = arith.constant 0 : i32
    %c0_i32_1 = arith.constant 0 : i32
    return %c0_i32, %c0_i32_0 : i32, i32
  }
  func.func @transform_13(%arg0: i32) -> (i32, i32) {
    %c0_i32 = arith.constant 0 : i32
    %c0_i32_0 = arith.constant 0 : i32
    %c0_i32_1 = arith.constant 0 : i32
    return %c0_i32, %c0_i32_0 : i32, i32
  }
  func.func @transform_14(%arg0: i32) -> (i32, i32) {
    %c0_i32 = arith.constant 0 : i32
    %c0_i32_0 = arith.constant 0 : i32
    %c0_i32_1 = arith.constant 0 : i32
    return %c0_i32, %c0_i32_0 : i32, i32
  }
  func.func @transform_15(%arg0: i32) -> (i32, i32) {
    %c0_i32 = arith.constant 0 : i32
    %c0_i32_0 = arith.constant 0 : i32
    %c0_i32_1 = arith.constant 0 : i32
    return %c0_i32, %c0_i32_0 : i32, i32
  }
  func.func @transform_16(%arg0: i32) -> (i32, i32) {
    %c0_i32 = arith.constant 0 : i32
    %c0_i32_0 = arith.constant 0 : i32
    %c0_i32_1 = arith.constant 0 : i32
    return %c0_i32, %c0_i32_0 : i32, i32
  }
  func.func @transform_17(%arg0: i32) -> (i32, i32) {
    %c0_i32 = arith.constant 0 : i32
    %c0_i32_0 = arith.constant 0 : i32
    %c0_i32_1 = arith.constant 0 : i32
    return %c0_i32, %c0_i32_0 : i32, i32
  }
  func.func @transform_18(%arg0: i32) -> (i32, i32, i32) {
    %c0_i32 = arith.constant 0 : i32
    %c0_i32_0 = arith.constant 0 : i32
    %c0_i32_1 = arith.constant 0 : i32
    return %arg0, %c0_i32, %c0_i32_0 : i32, i32, i32
  }
}

</mosaic_0001>

<llo_original>
// kernel: tpu_custom_call.1
$region0: #{tpu_custom_call.1}
  #allocation0 [shape = 'u32[]', space=smem, size = 0x4, offset = 0x4, fixed_abs, tag = 'smem constant byte address 0x4 - core index']
  #allocation1 [shape = 'u32[72,128]{1,0:T(1,128)}', space=vmem, size = 0x9000, scoped, tag = 'internal scratch']
  %s0 = inlined_call_operand.vmem [shape: f32[2,8,32], index: 0, kind: input, shape index: {}]
  %s1 = inlined_call_operand.vmem [shape: f32[2,8,32], index: 1, kind: input, shape index: {}]
  %s2 = inlined_call_operand.vmem [shape: bf16[32,24], index: 2, kind: input, shape index: {}]
  %s3 = inlined_call_operand.vmem [shape: f32[1,24], index: 3, kind: input, shape index: {}]
  %s4 = inlined_call_operand.vmem [shape: bf16[8,32], index: 4, kind: input, shape index: {}]
  %s5 = inlined_call_operand.vmem [shape: bf16[32,8], index: 5, kind: input, shape index: {}]
  %s6 = inlined_call_operand.vmem [shape: f32[1,8], index: 6, kind: input, shape index: {}]
  %s7 = inlined_call_operand.vmem [shape: bf16[32,16], index: 7, kind: input, shape index: {}]
  %s8 = inlined_call_operand.vmem [shape: f32[1,16], index: 8, kind: input, shape index: {}]
  %s9 = inlined_call_operand.vmem [shape: bf16[8,32], index: 9, kind: input, shape index: {}]
  %s10 = inlined_call_operand.vmem [shape: f32[1,32], index: 10, kind: input, shape index: {}]
  %s11 = inlined_call_operand.vmem [shape: f32[1,32], index: 11, kind: input, shape index: {}]
  %s12 = inlined_call_operand.vmem [shape: f32[1,32], index: 12, kind: input, shape index: {}]
  %s13 = inlined_call_operand.vmem [shape: f32[1,32], index: 13, kind: input, shape index: {}]
  %s14 = inlined_call_operand.vmem [shape: f32[1,32], index: 14, kind: input, shape index: {}]
  %s15 = inlined_call_operand.vmem [shape: f32[1,32], index: 15, kind: input, shape index: {}]
  %s16 = inlined_call_operand.vmem [shape: bf16[32,64], index: 16, kind: input, shape index: {}]
  %s17 = inlined_call_operand.vmem [shape: bf16[64,32], index: 17, kind: input, shape index: {}]
  %s18 = inlined_call_operand.hbm [shape: f32[2,8,32], index: 18, kind: output, shape index: {}]
  %s19 = sld [smem:[#allocation0]]
  $region105: #{tpu_custom_call.1} parent=0
    _
  %s21 = ssub.s32 1, %s19
  %s22 = scalar_select 0, %s21, %s19
  $region1: #{tpu_custom_call.1} parent=0
    #allocation2 [shape = 'u8[8192]{0}', space=vmem, size = 0x2000, scoped, tag = 'output window, operand 0']
    #allocation3 [shape = 's32[2]{0}', space=sflag, size = 0x8, scoped, tag = 'scoped memory for tpu_custom_call.1']
    %23 = vsyncpa [#allocation3], 0
    %s24 = scalar_lea.sflag [#allocation3], 1
    %25 = vsyncpa %s24, 0
    loop: start=0, step=1, limit=4
    $region2: #{tpu_custom_call.1} parent=1 // loop_pre_header
      _
    $region3: #{tpu_custom_call.1} parent=1 // loop_header
      %s27 = sphi 0, %s31
      %p28 = scmp.ge.s32.totalorder %s27, 4
      %s37 = sphi 0, %s39
      %s40 = sphi 0, %s37
      %s41 = sphi 0, %s40
      %s57 = sphi 0, %s41
      %s63 = sphi 0, %s65
      %s66 = sphi 0, %s63
      %s67 = sphi 0, %s66
      %s83 = sphi 0, %s67
      %s87 = sphi 0, %s87
      %s89 = sphi 0, %s87
      %s90 = sphi 0, %s89
      %s104 = sphi 0, %s90
      %s108 = sphi 0, %s108
      %s110 = sphi 0, %s108
      %s111 = sphi 0, %s110
      %s125 = sphi 0, %s111
      %s129 = sphi 0, %s129
      %s131 = sphi 0, %s129
      %s132 = sphi 0, %s131
      %s146 = sphi 0, %s132
      %s150 = sphi 0, %s150
      %s152 = sphi 0, %s150
      %s153 = sphi 0, %s152
      %s167 = sphi 0, %s153
      %s171 = sphi 0, %s171
      %s173 = sphi 0, %s171
      %s174 = sphi 0, %s173
      %s188 = sphi 0, %s174
      %s192 = sphi 0, %s192
      %s194 = sphi 0, %s192
      %s195 = sphi 0, %s194
      %s209 = sphi 0, %s195
      %s213 = sphi 0, %s213
      %s215 = sphi 0, %s213
      %s216 = sphi 0, %s215
      %s230 = sphi 0, %s216
      %s234 = sphi 0, %s234
      %s236 = sphi 0, %s234
      %s237 = sphi 0, %s236
      %s251 = sphi 0, %s237
      %s255 = sphi 0, %s255
      %s257 = sphi 0, %s255
      %s258 = sphi 0, %s257
      %s272 = sphi 0, %s258
      %s276 = sphi 0, %s276
      %s278 = sphi 0, %s276
      %s279 = sphi 0, %s278
      %s293 = sphi 0, %s279
      %s297 = sphi 0, %s297
      %s299 = sphi 0, %s297
      %s300 = sphi 0, %s299
      %s314 = sphi 0, %s300
      %s318 = sphi 0, %s318
      %s320 = sphi 0, %s318
      %s321 = sphi 0, %s320
      %s335 = sphi 0, %s321
      %s339 = sphi 0, %s339
      %s341 = sphi 0, %s339
      %s342 = sphi 0, %s341
      %s356 = sphi 0, %s342
      %s360 = sphi 0, %s360
      %s362 = sphi 0, %s360
      %s363 = sphi 0, %s362
      %s377 = sphi 0, %s363
      %s381 = sphi 0, %s381
      %s383 = sphi 0, %s381
      %s384 = sphi 0, %s383
      %s398 = sphi 0, %s384
      %s402 = sphi 0, %s402
      %s404 = sphi 0, %s402
      %s405 = sphi 0, %s404
      %s419 = sphi 0, %s405
      %s425 = sphi 0, %s427
      %s428 = sphi 0, %s425
      %s429 = sphi 0, %s428
      %s445 = sphi 0, %s429
    $region4: #{tpu_custom_call.1} parent=1 // loop_header_branch
      %30 = sbr.rel (%p28) target = $region8
    $region5: #{tpu_custom_call.1} parent=1 // loop_body
      %s32 = ssub.s32 %s27, 1
      %s33 = ssub.s32 %s27, 2
      %s34 = sadd.s32 %s27, 1
      %s35 = ssub.s32 %s27, %s34
      %p36 = scmp.eq.s32.totalorder %s35, 0
      %s38 = sadd.s32 %s37, 1
      %s39 = scalar_select %p36, %s37, %s38
      %p42 = pneg %p36
      %p43 = scmp.eq.s32.totalorder %s27, 1
      %p44 = por %p42, %p43
      %p45 = scmp.ne.s32.totalorder %s37, %s40
      %p46 = scmp.eq.s32.totalorder %s27, 0
      %p47 = por %p45, %p46
      %p48 = scmp.ne.s32.totalorder %s37, %s40
      %p49 = scmp.eq.s32.totalorder %s32, 1
      %p50 = por %p48, %p49
      %p51 = scmp.ne.s32.totalorder %s40, %s41
      %p52 = scmp.eq.s32.totalorder %s32, 0
      %p53 = por %p51, %p52
      %p54 = scmp.ne.s32.totalorder %s40, %s41
      %p55 = scmp.eq.s32.totalorder %s33, 1
      %p56 = por %p54, %p55
      %p58 = scmp.ne.s32.totalorder %s41, %s57
      %p59 = scmp.eq.s32.totalorder %s33, 0
      %p60 = por %p58, %p59
      %s61 = ssub.s32 %s27, %s34
      %p62 = scmp.eq.s32.totalorder %s61, 0
      %s64 = sadd.s32 %s63, 1
      %s65 = scalar_select %p62, %s63, %s64
      %p68 = pneg %p62
      %p69 = scmp.eq.s32.totalorder %s27, 1
      %p70 = por %p68, %p69
      %p71 = scmp.ne.s32.totalorder %s63, %s66
      %p72 = scmp.eq.s32.totalorder %s27, 0
      %p73 = por %p71, %p72
      %p74 = scmp.ne.s32.totalorder %s63, %s66
      %p75 = scmp.eq.s32.totalorder %s32, 1
      %p76 = por %p74, %p75
      %p77 = scmp.ne.s32.totalorder %s66, %s67
      %p78 = scmp.eq.s32.totalorder %s32, 0
      %p79 = por %p77, %p78
      %p80 = scmp.ne.s32.totalorder %s66, %s67
      %p81 = scmp.eq.s32.totalorder %s33, 1
      %p82 = por %p80, %p81
      %p84 = scmp.ne.s32.totalorder %s67, %s83
      %p85 = scmp.eq.s32.totalorder %s33, 0
      %p86 = por %p84, %p85
      %s88 = sadd.s32 %s87, 1
      %p91 = scmp.eq.s32.totalorder %s27, 1
      %p92 = scmp.ne.s32.totalorder %s87, %s89
      %p93 = scmp.eq.s32.totalorder %s27, 0
      %p94 = por %p92, %p93
      %p95 = scmp.ne.s32.totalorder %s87, %s89
      %p96 = scmp.eq.s32.totalorder %s32, 1
      %p97 = por %p95, %p96
      %p98 = scmp.ne.s32.totalorder %s89, %s90
      %p99 = scmp.eq.s32.totalorder %s32, 0
      %p100 = por %p98, %p99
      %p101 = scmp.ne.s32.totalorder %s89, %s90
      %p102 = scmp.eq.s32.totalorder %s33, 1
      %p103 = por %p101, %p102
      %p105 = scmp.ne.s32.totalorder %s90, %s104
      %p106 = scmp.eq.s32.totalorder %s33, 0
      %p107 = por %p105, %p106
      %s109 = sadd.s32 %s108, 1
      %p112 = scmp.eq.s32.totalorder %s27, 1
      %p113 = scmp.ne.s32.totalorder %s108, %s110
      %p114 = scmp.eq.s32.totalorder %s27, 0
      %p115 = por %p113, %p114
      %p116 = scmp.ne.s32.totalorder %s108, %s110
      %p117 = scmp.eq.s32.totalorder %s32, 1
      %p118 = por %p116, %p117
      %p119 = scmp.ne.s32.totalorder %s110, %s111
      %p120 = scmp.eq.s32.totalorder %s32, 0
      %p121 = por %p119, %p120
      %p122 = scmp.ne.s32.totalorder %s110, %s111
      %p123 = scmp.eq.s32.totalorder %s33, 1
      %p124 = por %p122, %p123
      %p126 = scmp.ne.s32.totalorder %s111, %s125
      %p127 = scmp.eq.s32.totalorder %s33, 0
      %p128 = por %p126, %p127
      %s130 = sadd.s32 %s129, 1
      %p133 = scmp.eq.s32.totalorder %s27, 1
      %p134 = scmp.ne.s32.totalorder %s129, %s131
      %p135 = scmp.eq.s32.totalorder %s27, 0
      %p136 = por %p134, %p135
      %p137 = scmp.ne.s32.totalorder %s129, %s131
      %p138 = scmp.eq.s32.totalorder %s32, 1
      %p139 = por %p137, %p138
      %p140 = scmp.ne.s32.totalorder %s131, %s132
      %p141 = scmp.eq.s32.totalorder %s32, 0
      %p142 = por %p140, %p141
      %p143 = scmp.ne.s32.totalorder %s131, %s132
      %p144 = scmp.eq.s32.totalorder %s33, 1
      %p145 = por %p143, %p144
      %p147 = scmp.ne.s32.totalorder %s132, %s146
      %p148 = scmp.eq.s32.totalorder %s33, 0
      %p149 = por %p147, %p148
      %s151 = sadd.s32 %s150, 1
      %p154 = scmp.eq.s32.totalorder %s27, 1
      %p155 = scmp.ne.s32.totalorder %s150, %s152
      %p156 = scmp.eq.s32.totalorder %s27, 0
      %p157 = por %p155, %p156
      %p158 = scmp.ne.s32.totalorder %s150, %s152
      %p159 = scmp.eq.s32.totalorder %s32, 1
      %p160 = por %p158, %p159
      %p161 = scmp.ne.s32.totalorder %s152, %s153
      %p162 = scmp.eq.s32.totalorder %s32, 0
      %p163 = por %p161, %p162
      %p164 = scmp.ne.s32.totalorder %s152, %s153
      %p165 = scmp.eq.s32.totalorder %s33, 1
      %p166 = por %p164, %p165
      %p168 = scmp.ne.s32.totalorder %s153, %s167
      %p169 = scmp.eq.s32.totalorder %s33, 0
      %p170 = por %p168, %p169
      %s172 = sadd.s32 %s171, 1
      %p175 = scmp.eq.s32.totalorder %s27, 1
      %p176 = scmp.ne.s32.totalorder %s171, %s173
      %p177 = scmp.eq.s32.totalorder %s27, 0
      %p178 = por %p176, %p177
      %p179 = scmp.ne.s32.totalorder %s171, %s173
      %p180 = scmp.eq.s32.totalorder %s32, 1
      %p181 = por %p179, %p180
      %p182 = scmp.ne.s32.totalorder %s173, %s174
      %p183 = scmp.eq.s32.totalorder %s32, 0
      %p184 = por %p182, %p183
      %p185 = scmp.ne.s32.totalorder %s173, %s174
      %p186 = scmp.eq.s32.totalorder %s33, 1
      %p187 = por %p185, %p186
      %p189 = scmp.ne.s32.totalorder %s174, %s188
      %p190 = scmp.eq.s32.totalorder %s33, 0
      %p191 = por %p189, %p190
      %s193 = sadd.s32 %s192, 1
      %p196 = scmp.eq.s32.totalorder %s27, 1
      %p197 = scmp.ne.s32.totalorder %s192, %s194
      %p198 = scmp.eq.s32.totalorder %s27, 0
      %p199 = por %p197, %p198
      %p200 = scmp.ne.s32.totalorder %s192, %s194
      %p201 = scmp.eq.s32.totalorder %s32, 1
      %p202 = por %p200, %p201
      %p203 = scmp.ne.s32.totalorder %s194, %s195
      %p204 = scmp.eq.s32.totalorder %s32, 0
      %p205 = por %p203, %p204
      %p206 = scmp.ne.s32.totalorder %s194, %s195
      %p207 = scmp.eq.s32.totalorder %s33, 1
      %p208 = por %p206, %p207
      %p210 = scmp.ne.s32.totalorder %s195, %s209
      %p211 = scmp.eq.s32.totalorder %s33, 0
      %p212 = por %p210, %p211
      %s214 = sadd.s32 %s213, 1
      %p217 = scmp.eq.s32.totalorder %s27, 1
      %p218 = scmp.ne.s32.totalorder %s213, %s215
      %p219 = scmp.eq.s32.totalorder %s27, 0
      %p220 = por %p218, %p219
      %p221 = scmp.ne.s32.totalorder %s213, %s215
      %p222 = scmp.eq.s32.totalorder %s32, 1
      %p223 = por %p221, %p222
      %p224 = scmp.ne.s32.totalorder %s215, %s216
      %p225 = scmp.eq.s32.totalorder %s32, 0
      %p226 = por %p224, %p225
      %p227 = scmp.ne.s32.totalorder %s215, %s216
      %p228 = scmp.eq.s32.totalorder %s33, 1
      %p229 = por %p227, %p228
      %p231 = scmp.ne.s32.totalorder %s216, %s230
      %p232 = scmp.eq.s32.totalorder %s33, 0
      %p233 = por %p231, %p232
      %s235 = sadd.s32 %s234, 1
      %p238 = scmp.eq.s32.totalorder %s27, 1
      %p239 = scmp.ne.s32.totalorder %s234, %s236
      %p240 = scmp.eq.s32.totalorder %s27, 0
      %p241 = por %p239, %p240
      %p242 = scmp.ne.s32.totalorder %s234, %s236
      %p243 = scmp.eq.s32.totalorder %s32, 1
      %p244 = por %p242, %p243
      %p245 = scmp.ne.s32.totalorder %s236, %s237
      %p246 = scmp.eq.s32.totalorder %s32, 0
      %p247 = por %p245, %p246
      %p248 = scmp.ne.s32.totalorder %s236, %s237
      %p249 = scmp.eq.s32.totalorder %s33, 1
      %p250 = por %p248, %p249
      %p252 = scmp.ne.s32.totalorder %s237, %s251
      %p253 = scmp.eq.s32.totalorder %s33, 0
      %p254 = por %p252, %p253
      %s256 = sadd.s32 %s255, 1
      %p259 = scmp.eq.s32.totalorder %s27, 1
      %p260 = scmp.ne.s32.totalorder %s255, %s257
      %p261 = scmp.eq.s32.totalorder %s27, 0
      %p262 = por %p260, %p261
      %p263 = scmp.ne.s32.totalorder %s255, %s257
      %p264 = scmp.eq.s32.totalorder %s32, 1
      %p265 = por %p263, %p264
      %p266 = scmp.ne.s32.totalorder %s257, %s258
      %p267 = scmp.eq.s32.totalorder %s32, 0
      %p268 = por %p266, %p267
      %p269 = scmp.ne.s32.totalorder %s257, %s258
      %p270 = scmp.eq.s32.totalorder %s33, 1
      %p271 = por %p269, %p270
      %p273 = scmp.ne.s32.totalorder %s258, %s272
      %p274 = scmp.eq.s32.totalorder %s33, 0
      %p275 = por %p273, %p274
      %s277 = sadd.s32 %s276, 1
      %p280 = scmp.eq.s32.totalorder %s27, 1
      %p281 = scmp.ne.s32.totalorder %s276, %s278
      %p282 = scmp.eq.s32.totalorder %s27, 0
      %p283 = por %p281, %p282
      %p284 = scmp.ne.s32.totalorder %s276, %s278
      %p285 = scmp.eq.s32.totalorder %s32, 1
      %p286 = por %p284, %p285
      %p287 = scmp.ne.s32.totalorder %s278, %s279
      %p288 = scmp.eq.s32.totalorder %s32, 0
      %p289 = por %p287, %p288
      %p290 = scmp.ne.s32.totalorder %s278, %s279
      %p291 = scmp.eq.s32.totalorder %s33, 1
      %p292 = por %p290, %p291
      %p294 = scmp.ne.s32.totalorder %s279, %s293
      %p295 = scmp.eq.s32.totalorder %s33, 0
      %p296 = por %p294, %p295
      %s298 = sadd.s32 %s297, 1
      %p301 = scmp.eq.s32.totalorder %s27, 1
      %p302 = scmp.ne.s32.totalorder %s297, %s299
      %p303 = scmp.eq.s32.totalorder %s27, 0
      %p304 = por %p302, %p303
      %p305 = scmp.ne.s32.totalorder %s297, %s299
      %p306 = scmp.eq.s32.totalorder %s32, 1
      %p307 = por %p305, %p306
      %p308 = scmp.ne.s32.totalorder %s299, %s300
      %p309 = scmp.eq.s32.totalorder %s32, 0
      %p310 = por %p308, %p309
      %p311 = scmp.ne.s32.totalorder %s299, %s300
      %p312 = scmp.eq.s32.totalorder %s33, 1
      %p313 = por %p311, %p312
      %p315 = scmp.ne.s32.totalorder %s300, %s314
      %p316 = scmp.eq.s32.totalorder %s33, 0
      %p317 = por %p315, %p316
      %s319 = sadd.s32 %s318, 1
      %p322 = scmp.eq.s32.totalorder %s27, 1
      %p323 = scmp.ne.s32.totalorder %s318, %s320
      %p324 = scmp.eq.s32.totalorder %s27, 0
      %p325 = por %p323, %p324
      %p326 = scmp.ne.s32.totalorder %s318, %s320
      %p327 = scmp.eq.s32.totalorder %s32, 1
      %p328 = por %p326, %p327
      %p329 = scmp.ne.s32.totalorder %s320, %s321
      %p330 = scmp.eq.s32.totalorder %s32, 0
      %p331 = por %p329, %p330
      %p332 = scmp.ne.s32.totalorder %s320, %s321
      %p333 = scmp.eq.s32.totalorder %s33, 1
      %p334 = por %p332, %p333
      %p336 = scmp.ne.s32.totalorder %s321, %s335
      %p337 = scmp.eq.s32.totalorder %s33, 0
      %p338 = por %p336, %p337
      %s340 = sadd.s32 %s339, 1
      %p343 = scmp.eq.s32.totalorder %s27, 1
      %p344 = scmp.ne.s32.totalorder %s339, %s341
      %p345 = scmp.eq.s32.totalorder %s27, 0
      %p346 = por %p344, %p345
      %p347 = scmp.ne.s32.totalorder %s339, %s341
      %p348 = scmp.eq.s32.totalorder %s32, 1
      %p349 = por %p347, %p348
      %p350 = scmp.ne.s32.totalorder %s341, %s342
      %p351 = scmp.eq.s32.totalorder %s32, 0
      %p352 = por %p350, %p351
      %p353 = scmp.ne.s32.totalorder %s341, %s342
      %p354 = scmp.eq.s32.totalorder %s33, 1
      %p355 = por %p353, %p354
      %p357 = scmp.ne.s32.totalorder %s342, %s356
      %p358 = scmp.eq.s32.totalorder %s33, 0
      %p359 = por %p357, %p358
      %s361 = sadd.s32 %s360, 1
      %p364 = scmp.eq.s32.totalorder %s27, 1
      %p365 = scmp.ne.s32.totalorder %s360, %s362
      %p366 = scmp.eq.s32.totalorder %s27, 0
      %p367 = por %p365, %p366
      %p368 = scmp.ne.s32.totalorder %s360, %s362
      %p369 = scmp.eq.s32.totalorder %s32, 1
      %p370 = por %p368, %p369
      %p371 = scmp.ne.s32.totalorder %s362, %s363
      %p372 = scmp.eq.s32.totalorder %s32, 0
      %p373 = por %p371, %p372
      %p374 = scmp.ne.s32.totalorder %s362, %s363
      %p375 = scmp.eq.s32.totalorder %s33, 1
      %p376 = por %p374, %p375
      %p378 = scmp.ne.s32.totalorder %s363, %s377
      %p379 = scmp.eq.s32.totalorder %s33, 0
      %p380 = por %p378, %p379
      %s382 = sadd.s32 %s381, 1
      %p385 = scmp.eq.s32.totalorder %s27, 1
      %p386 = scmp.ne.s32.totalorder %s381, %s383
      %p387 = scmp.eq.s32.totalorder %s27, 0
      %p388 = por %p386, %p387
      %p389 = scmp.ne.s32.totalorder %s381, %s383
      %p390 = scmp.eq.s32.totalorder %s32, 1
      %p391 = por %p389, %p390
      %p392 = scmp.ne.s32.totalorder %s383, %s384
      %p393 = scmp.eq.s32.totalorder %s32, 0
      %p394 = por %p392, %p393
      %p395 = scmp.ne.s32.totalorder %s383, %s384
      %p396 = scmp.eq.s32.totalorder %s33, 1
      %p397 = por %p395, %p396
      %p399 = scmp.ne.s32.totalorder %s384, %s398
      %p400 = scmp.eq.s32.totalorder %s33, 0
      %p401 = por %p399, %p400
      %s403 = sadd.s32 %s402, 1
      %p406 = scmp.eq.s32.totalorder %s27, 1
      %p407 = scmp.ne.s32.totalorder %s402, %s404
      %p408 = scmp.eq.s32.totalorder %s27, 0
      %p409 = por %p407, %p408
      %p410 = scmp.ne.s32.totalorder %s402, %s404
      %p411 = scmp.eq.s32.totalorder %s32, 1
      %p412 = por %p410, %p411
      %p413 = scmp.ne.s32.totalorder %s404, %s405
      %p414 = scmp.eq.s32.totalorder %s32, 0
      %p415 = por %p413, %p414
      %p416 = scmp.ne.s32.totalorder %s404, %s405
      %p417 = scmp.eq.s32.totalorder %s33, 1
      %p418 = por %p416, %p417
      %p420 = scmp.ne.s32.totalorder %s405, %s419
      %p421 = scmp.eq.s32.totalorder %s33, 0
      %p422 = por %p420, %p421
      %s423 = ssub.s32 %s27, %s34
      %p424 = scmp.eq.s32.totalorder %s423, 0
      %s426 = sadd.s32 %s425, 1
      %s427 = scalar_select %p424, %s425, %s426
      %p430 = pneg %p424
      %p431 = scmp.eq.s32.totalorder %s27, 1
      %p432 = por %p430, %p431
      %p433 = scmp.ne.s32.totalorder %s425, %s428
      %p434 = scmp.eq.s32.totalorder %s27, 0
      %p435 = por %p433, %p434
      %p436 = scmp.ne.s32.totalorder %s425, %s428
      %p437 = scmp.eq.s32.totalorder %s32, 1
      %p438 = por %p436, %p437
      %p439 = scmp.ne.s32.totalorder %s428, %s429
      %p440 = scmp.eq.s32.totalorder %s32, 0
      %p441 = por %p439, %p440
      %p442 = scmp.ne.s32.totalorder %s428, %s429
      %p443 = scmp.eq.s32.totalorder %s33, 1
      %p444 = por %p442, %p443
      %p446 = scmp.ne.s32.totalorder %s429, %s445
      %p447 = scmp.eq.s32.totalorder %s33, 0
      %p448 = por %p446, %p447
      %p449 = scmp.le.s32.totalorder 1, %s27
      %p450 = scmp.lt.s32.totalorder %s27, 3
      %p451 = pnand %p449, %p450
      %p452 = pneg %p451
      // Predicated region
      $region9: #{tpu_custom_call.1} parent=5 // pred_check
        _
      $region10: #{tpu_custom_call.1} parent=5 // pred_check_branch
        %454 = sbr.rel (%p451) target = $region12
      $region11: #{tpu_custom_call.1} parent=5 // pred_region
        %s455 = ssub.s32 %s27, 1
        // Predicated region
        $region13: #{tpu_custom_call.1} parent=11 // pred_check
          %p456 = pneg %p100
        $region14: #{tpu_custom_call.1} parent=11 // pred_check_branch
          %458 = sbr.rel (%p456) target = $region16
        $region15: #{tpu_custom_call.1} parent=11 // pred_region
          _
        $region16: #{tpu_custom_call.1} parent=11 // pred_fallthru
          _
        // Predicated region
        $region17: #{tpu_custom_call.1} parent=11 // pred_check
          %p459 = pneg %p121
        $region18: #{tpu_custom_call.1} parent=11 // pred_check_branch
          %461 = sbr.rel (%p459) target = $region20
        $region19: #{tpu_custom_call.1} parent=11 // pred_region
          _
        $region20: #{tpu_custom_call.1} parent=11 // pred_fallthru
          _
        // Predicated region
        $region21: #{tpu_custom_call.1} parent=11 // pred_check
          %p462 = pneg %p142
        $region22: #{tpu_custom_call.1} parent=11 // pred_check_branch
          %464 = sbr.rel (%p462) target = $region24
        $region23: #{tpu_custom_call.1} parent=11 // pred_region
          _
        $region24: #{tpu_custom_call.1} parent=11 // pred_fallthru
          _
        // Predicated region
        $region25: #{tpu_custom_call.1} parent=11 // pred_check
          %p465 = pneg %p163
        $region26: #{tpu_custom_call.1} parent=11 // pred_check_branch
          %467 = sbr.rel (%p465) target = $region28
        $region27: #{tpu_custom_call.1} parent=11 // pred_region
          _
        $region28: #{tpu_custom_call.1} parent=11 // pred_fallthru
          _
        // Predicated region
        $region29: #{tpu_custom_call.1} parent=11 // pred_check
          %p468 = pneg %p184
        $region30: #{tpu_custom_call.1} parent=11 // pred_check_branch
          %470 = sbr.rel (%p468) target = $region32
        $region31: #{tpu_custom_call.1} parent=11 // pred_region
          _
        $region32: #{tpu_custom_call.1} parent=11 // pred_fallthru
          _
        // Predicated region
        $region33: #{tpu_custom_call.1} parent=11 // pred_check
          %p471 = pneg %p205
        $region34: #{tpu_custom_call.1} parent=11 // pred_check_branch
          %473 = sbr.rel (%p471) target = $region36
        $region35: #{tpu_custom_call.1} parent=11 // pred_region
          _
        $region36: #{tpu_custom_call.1} parent=11 // pred_fallthru
          _
        // Predicated region
        $region37: #{tpu_custom_call.1} parent=11 // pred_check
          %p474 = pneg %p226
        $region38: #{tpu_custom_call.1} parent=11 // pred_check_branch
          %476 = sbr.rel (%p474) target = $region40
        $region39: #{tpu_custom_call.1} parent=11 // pred_region
          _
        $region40: #{tpu_custom_call.1} parent=11 // pred_fallthru
          _
        // Predicated region
        $region41: #{tpu_custom_call.1} parent=11 // pred_check
          %p477 = pneg %p247
        $region42: #{tpu_custom_call.1} parent=11 // pred_check_branch
          %479 = sbr.rel (%p477) target = $region44
        $region43: #{tpu_custom_call.1} parent=11 // pred_region
          _
        $region44: #{tpu_custom_call.1} parent=11 // pred_fallthru
          _
        // Predicated region
        $region45: #{tpu_custom_call.1} parent=11 // pred_check
          %p480 = pneg %p268
        $region46: #{tpu_custom_call.1} parent=11 // pred_check_branch
          %482 = sbr.rel (%p480) target = $region48
        $region47: #{tpu_custom_call.1} parent=11 // pred_region
          _
        $region48: #{tpu_custom_call.1} parent=11 // pred_fallthru
          _
        // Predicated region
        $region49: #{tpu_custom_call.1} parent=11 // pred_check
          %p483 = pneg %p289
        $region50: #{tpu_custom_call.1} parent=11 // pred_check_branch
          %485 = sbr.rel (%p483) target = $region52
        $region51: #{tpu_custom_call.1} parent=11 // pred_region
          _
        $region52: #{tpu_custom_call.1} parent=11 // pred_fallthru
          _
        // Predicated region
        $region53: #{tpu_custom_call.1} parent=11 // pred_check
          %p486 = pneg %p310
        $region54: #{tpu_custom_call.1} parent=11 // pred_check_branch
          %488 = sbr.rel (%p486) target = $region56
        $region55: #{tpu_custom_call.1} parent=11 // pred_region
          _
        $region56: #{tpu_custom_call.1} parent=11 // pred_fallthru
          _
        // Predicated region
        $region57: #{tpu_custom_call.1} parent=11 // pred_check
          %p489 = pneg %p331
        $region58: #{tpu_custom_call.1} parent=11 // pred_check_branch
          %491 = sbr.rel (%p489) target = $region60
        $region59: #{tpu_custom_call.1} parent=11 // pred_region
          _
        $region60: #{tpu_custom_call.1} parent=11 // pred_fallthru
          _
        // Predicated region
        $region61: #{tpu_custom_call.1} parent=11 // pred_check
          %p492 = pneg %p352
        $region62: #{tpu_custom_call.1} parent=11 // pred_check_branch
          %494 = sbr.rel (%p492) target = $region64
        $region63: #{tpu_custom_call.1} parent=11 // pred_region
          _
        $region64: #{tpu_custom_call.1} parent=11 // pred_fallthru
          _
        // Predicated region
        $region65: #{tpu_custom_call.1} parent=11 // pred_check
          %p495 = pneg %p373
        $region66: #{tpu_custom_call.1} parent=11 // pred_check_branch
          %497 = sbr.rel (%p495) target = $region68
        $region67: #{tpu_custom_call.1} parent=11 // pred_region
          _
        $region68: #{tpu_custom_call.1} parent=11 // pred_fallthru
          _
        // Predicated region
        $region69: #{tpu_custom_call.1} parent=11 // pred_check
          %p498 = pneg %p394
        $region70: #{tpu_custom_call.1} parent=11 // pred_check_branch
          %500 = sbr.rel (%p498) target = $region72
        $region71: #{tpu_custom_call.1} parent=11 // pred_region
          _
        $region72: #{tpu_custom_call.1} parent=11 // pred_fallthru
          _
        // Predicated region
        $region73: #{tpu_custom_call.1} parent=11 // pred_check
          %p501 = pneg %p415
        $region74: #{tpu_custom_call.1} parent=11 // pred_check_branch
          %503 = sbr.rel (%p501) target = $region76
        $region75: #{tpu_custom_call.1} parent=11 // pred_region
          _
        $region76: #{tpu_custom_call.1} parent=11 // pred_fallthru
          _
      $region12: #{tpu_custom_call.1} parent=5 // pred_fallthru
        _
      %p504 = scmp.lt.s32.totalorder %s27, 2
      // Predicated region
      $region77: #{tpu_custom_call.1} parent=5 // pred_check
        %p505 = pneg %p504
      $region78: #{tpu_custom_call.1} parent=5 // pred_check_branch
        %507 = sbr.rel (%p505) target = $region80
      $region79: #{tpu_custom_call.1} parent=5 // pred_region
        // Predicated region
        $region81: #{tpu_custom_call.1} parent=79 // pred_check
          %p508 = pneg %p47
        $region82: #{tpu_custom_call.1} parent=79 // pred_check_branch
          %510 = sbr.rel (%p508) target = $region84
        $region83: #{tpu_custom_call.1} parent=79 // pred_region
          %p511 = scmp.lt.s32.totalorder %s27, 1
          %s512 = scalar_select %p511, %s27, 1
          %s513 = smul.addr %s512, 8
          %s514 = scalar_lea.vmem %s0, %s513
        $region84: #{tpu_custom_call.1} parent=79 // pred_fallthru
          _
        // Predicated region
        $region85: #{tpu_custom_call.1} parent=79 // pred_check
          %p515 = pneg %p73
        $region86: #{tpu_custom_call.1} parent=79 // pred_check_branch
          %517 = sbr.rel (%p515) target = $region88
        $region87: #{tpu_custom_call.1} parent=79 // pred_region
          %p518 = scmp.lt.s32.totalorder %s27, 1
          %s519 = scalar_select %p518, %s27, 1
          %s520 = smul.addr %s519, 8
          %s521 = scalar_lea.vmem %s1, %s520
        $region88: #{tpu_custom_call.1} parent=79 // pred_fallthru
          _
      $region80: #{tpu_custom_call.1} parent=5 // pred_fallthru
        _
      %p522 = scmp.le.s32.totalorder 1, %s27
      %p523 = scmp.lt.s32.totalorder %s27, 3
      %p524 = pnand %p522, %p523
      %p525 = pneg %p524
      // Predicated region
      $region89: #{tpu_custom_call.1} parent=5 // pred_check
        _
      $region90: #{tpu_custom_call.1} parent=5 // pred_check_branch
        %527 = sbr.rel (%p524) target = $region92
      $region91: #{tpu_custom_call.1} parent=5 // pred_region
        %s528 = ssub.s32 %s27, 1
        %p529 = scmp.lt.s32.totalorder %s32, 1
        %s530 = scalar_select %p529, %s32, 1
        %s531 = smul.addr %s530, 8
        %s532 = scalar_lea.vmem %s0, %s531
        %p533 = pneg %p53
        %p534 = pneg %p50
        %p535 = scmp.lt.s32.totalorder %s32, 1
        %s536 = scalar_select %p535, %s32, 1
        %s537 = smul.addr %s536, 8
        %s538 = scalar_lea.vmem %s1, %s537
        %p539 = pneg %p79
        %p540 = pneg %p76
        %p541 = pneg %p100
        %p542 = pneg %p97
        %p543 = pneg %p121
        %p544 = pneg %p118
        %p545 = pneg %p142
        %p546 = pneg %p139
        %p547 = pneg %p163
        %p548 = pneg %p160
        %p549 = pneg %p184
        %p550 = pneg %p181
        %p551 = pneg %p205
        %p552 = pneg %p202
        %p553 = pneg %p226
        %p554 = pneg %p223
        %p555 = pneg %p247
        %p556 = pneg %p244
        %p557 = pneg %p268
        %p558 = pneg %p265
        %p559 = pneg %p289
        %p560 = pneg %p286
        %p561 = pneg %p310
        %p562 = pneg %p307
        %p563 = pneg %p331
        %p564 = pneg %p328
        %p565 = pneg %p352
        %p566 = pneg %p349
        %p567 = pneg %p373
        %p568 = pneg %p370
        %p569 = pneg %p394
        %p570 = pneg %p391
        %p571 = pneg %p415
        %p572 = pneg %p412
        %p573 = pneg %p441
        %p574 = pneg %p438
        %s575 = sand.u32 %s428, 1
        %s576 = scalar_lea.sflag [#allocation3], %s575
        %s577 = sand.u32 %s428, 1
        %s578 = smul.addr %s577, 8
        %s579 = scalar_lea.vmem [#allocation2], %s578
        %p580 = scmp.lt.s32.totalorder %s32, 1
        %s581 = scalar_select %p580, %s32, 1
        %s582 = smul.addr %s581, 8
        %s583 = scalar_lea.vmem %s0, %s582
        %p584 = scmp.lt.s32.totalorder %s32, 1
        %s585 = scalar_select %p584, %s32, 1
        %s586 = smul.addr %s585, 8
        %s587 = scalar_lea.vmem %s1, %s586
        %v589 = vld [vmem:[%s583] sm:$0xff]
        %v590 = vld [vmem:[%s587] sm:$0xff]
        %v591 = vpack.c.bf16 %v590, %v590
        %v592 = vlaneseq
        %v593 = vshrl.u32 %v592, 7
        %v594 = vlaneseq
        %v595 = vand.u32 %v594, 127
        %vm596 = vcmp.ge.s32.totalorder %v593, %v595
        %v597 = vpack.c.bf16 %v589, %v589
        %v598 = vld [vmem:[%s2] sm:$0xf]
        %v599 = vld [vmem:[%s2 + $0x4] sm:$0xf]
        %v600 = vld [vmem:[%s2 + $0x8] sm:$0xf]
        %v601 = vld [vmem:[%s2 + $0xc] sm:$0xf]
        %v602 = vld [vmem:[%s3] sm:$0x1]
        %v604 = vperm.slane %v602, 0
        %v610 = vunpack.c.l.b16 %v598
        %v611 = vunpack.c.l.b16 %v599
        %v612 = vunpack.c.l.b16 %v600
        %v613 = vunpack.c.l.b16 %v601
        %v614 = vpack.c.b16 %v611, %v610
        %v615 = vpack.c.b16 %v613, %v612
        %vm618 = vcmask 261120
        %v620 = vsel %vm618, %v597, 0
        %622 = vmatpush.bf16.msra.mxu0 0
        %623 = vmatpush.bf16.msra.mxu0 0
        %624 = vmatpush.bf16.msra.mxu0 0
        %625 = vmatpush.bf16.msra.mxu0 0
        %626 = vmatpush.bf16.msra.mxu0 0
        %627 = vmatpush.bf16.msra.mxu0 0
        %628 = vmatpush.bf16.msra.mxu0 %v615
        %629 = vmatpush.bf16.msra.mxu0 %v614
        %630 = vmatmul.bf16.gmra.mxu0 %v620
        %v631 = vpop.f32.mrf.mxu0
        %v632 = vadd.f32 %v604, %v631
        %v633 = vpop.f32.mrf.mxu0
        %634 = vdwg.mxu0
        %v635 = vpack.c.bf16 %v632, %v632
        %637 = vrot.lane.b32.xlu0 %v635, 120
        %v638 = vpop.permute.xlu0 %637
        %vm639 = vcmask 64512
        %v641 = vsel %vm639, %v635, 0
        %v644 = vsel %vm639, %v638, 0
        %646 = vmatpush.bf16.xpose.msra.mxu0 0
        %647 = vmatpush.bf16.xpose.msra.mxu0 0
        %648 = vmatpush.bf16.xpose.msra.mxu0 0
        %649 = vmatpush.bf16.xpose.msra.mxu0 0
        %650 = vmatpush.bf16.xpose.msra.mxu0 0
        %651 = vmatpush.bf16.xpose.msra.mxu0 0
        %652 = vmatpush.bf16.xpose.msra.mxu0 0
        %653 = vmatpush.bf16.xpose.msra.mxu0 %v644
        %654 = vmatmul.bf16.gmra.mxu0 %v641
        %v655 = vpop.f32.mrf.mxu0
        %v656 = vadd.f32 0.0, %v655
        %v657 = vpop.f32.mrf.mxu0
        %658 = vdwg.mxu0
        %v659 = vsel %vm596, -1e+09, %v656
        %v660 = vsel %vm639, %v659, -inf
        %661 = vmax.xlane.f32.xlu0 %v660
        %v662 = vpop.xlane.xlu0 %661
        %v663 = vsub.f32 %v659, %v662
        %v664 = vmul.f32 %v663, 1.442695
        %v665 = vpow.pop %v664
        %v666 = vsel %vm639, %v665, 0.0
        %667 = vadd.xlane.f32.xlu0 %v666
        %v668 = vpop.xlane.xlu0 %667
        %v669 = vrcp.pop %v668
        %v670 = vmul.f32 %v665, %v669
        %v671 = vpack.c.bf16 %v670, %v670
        %672 = vrot.lane.b32.xlu0 %v635, 112
        %v673 = vpop.permute.xlu0 %672
        %v675 = vsel %vm639, %v671, 0
        %vm677 = vcmask 1043456
        %v679 = vsel %vm677, %v673, 0
        %681 = vmatpush.bf16.msra.mxu0 0
        %682 = vmatpush.bf16.msra.mxu0 0
        %683 = vmatpush.bf16.msra.mxu0 0
        %684 = vmatpush.bf16.msra.mxu0 0
        %685 = vmatpush.bf16.msra.mxu0 0
        %686 = vmatpush.bf16.msra.mxu0 0
        %687 = vmatpush.bf16.msra.mxu0 0
        %688 = vmatpush.bf16.msra.mxu0 %v679
        %689 = vmatmul.bf16.gmra.mxu0 %v675
        %v690 = vpop.f32.mrf.mxu0
        %v691 = vadd.f32 0.0, %v690
        %v692 = vpop.f32.mrf.mxu0
        %693 = vdwg.mxu0
        %v694 = vpack.c.bf16 %v691, %v691
        %v695 = vld [vmem:[%s4] sm:$0xf]
        %v697 = vsel %vm639, %v694, 0
        %v700 = vsel %vm677, %v695, 0
        %702 = vmatpush.bf16.msra.mxu0 0
        %703 = vmatpush.bf16.msra.mxu0 0
        %704 = vmatpush.bf16.msra.mxu0 0
        %705 = vmatpush.bf16.msra.mxu0 0
        %706 = vmatpush.bf16.msra.mxu0 0
        %707 = vmatpush.bf16.msra.mxu0 0
        %708 = vmatpush.bf16.msra.mxu0 0
        %709 = vmatpush.bf16.msra.mxu0 %v700
        %710 = vmatmul.bf16.gmra.mxu0 %v697
        %v711 = vpop.f32.mrf.mxu0
        %v712 = vadd.f32 %v589, %v711
        %v713 = vpop.f32.mrf.mxu0
        %714 = vdwg.mxu0
        %v715 = vld [vmem:[%s10] sm:$0x1]
        %v716 = vld [vmem:[%s11] sm:$0x1]
        %v717 = vsel %vm618, %v712, 0.0
        %718 = vadd.xlane.f32.xlu0 %v717
        %v719 = vpop.xlane.xlu0 %718
        %v720 = vrcp.pop 32.0
        %v721 = vmul.f32 32.0, %v720
        %v722 = vsub.f32 1.0, %v721
        %v723 = vmul.f32 %v720, %v722
        %v724 = vadd.f32 %v720, %v723
        %vm725 = vweird.f32 %v720
        %v726 = vsel %vm725, %v720, %v724
        %v727 = vmul.f32 %v719, %v726
        %v728 = vsub.f32 %v712, %v727
        %v729 = vmul.f32 %v728, %v728
        %v730 = vsel %vm618, %v729, 0.0
        %731 = vadd.xlane.f32.xlu0 %v730
        %v732 = vpop.xlane.xlu0 %731
        %v733 = vmul.f32 %v732, %v726
        %v734 = vadd.f32 %v733, 1e-05
        %v735 = vrsqrt.pop %v734
        %v736 = vmul.f32 %v735, %v734
        %v737 = vmul.f32 %v736, %v735
        %v738 = vmul.f32 0.5, %v737
        %v739 = vsub.f32 1.5, %v738
        %v740 = vmul.f32 %v735, %v739
        %vm741 = vweird.f32 %v734
        %vm742 = vweird.f32 %v735
        %vm743 = vmor %vm741, %vm742
        %v744 = vsel %vm743, %v735, %v740
        %v745 = vmul.f32 %v728, %v744
        %v747 = vperm.slane %v715, 0
        %v749 = vmul.f32 %v745, %v747
        %v751 = vperm.slane %v716, 0
        %v753 = vadd.f32 %v749, %v751
        %v754 = vpack.c.bf16 %v753, %v753
        %v755 = vld [vmem:[%s5] sm:$0xf]
        %v756 = vld [vmem:[%s5 + $0x4] sm:$0xf]
        %v757 = vld [vmem:[%s5 + $0x8] sm:$0xf]
        %v758 = vld [vmem:[%s5 + $0xc] sm:$0xf]
        %v759 = vld [vmem:[%s6] sm:$0x1]
        %v761 = vperm.slane %v759, 0
        %v767 = vunpack.c.l.b16 %v755
        %v768 = vunpack.c.l.b16 %v756
        %v769 = vunpack.c.l.b16 %v757
        %v770 = vunpack.c.l.b16 %v758
        %v771 = vpack.c.b16 %v768, %v767
        %v772 = vpack.c.b16 %v770, %v769
        %v776 = vsel %vm618, %v754, 0
        %778 = vmatpush.bf16.msra.mxu0 0
        %779 = vmatpush.bf16.msra.mxu0 0
        %780 = vmatpush.bf16.msra.mxu0 0
        %781 = vmatpush.bf16.msra.mxu0 0
        %782 = vmatpush.bf16.msra.mxu0 0
        %783 = vmatpush.bf16.msra.mxu0 0
        %784 = vmatpush.bf16.msra.mxu0 %v772
        %785 = vmatpush.bf16.msra.mxu0 %v771
        %786 = vmatmul.bf16.gmra.mxu0 %v776
        %v787 = vpop.f32.mrf.mxu0
        %v788 = vadd.f32 %v761, %v787
        %v789 = vpop.f32.mrf.mxu0
        %790 = vdwg.mxu0
        %v791 = vld [vmem:[%s7] sm:$0xf]
        %v792 = vld [vmem:[%s7 + $0x4] sm:$0xf]
        %v793 = vld [vmem:[%s7 + $0x8] sm:$0xf]
        %v794 = vld [vmem:[%s7 + $0xc] sm:$0xf]
        %v795 = vld [vmem:[%s8] sm:$0x1]
        %v797 = vperm.slane %v795, 0
        %v803 = vunpack.c.l.b16 %v791
        %v804 = vunpack.c.l.b16 %v792
        %v805 = vunpack.c.l.b16 %v793
        %v806 = vunpack.c.l.b16 %v794
        %v807 = vpack.c.b16 %v804, %v803
        %v808 = vpack.c.b16 %v806, %v805
        %v812 = vsel %vm618, %v591, 0
        %814 = vmatpush.bf16.msra.mxu0 0
        %815 = vmatpush.bf16.msra.mxu0 0
        %816 = vmatpush.bf16.msra.mxu0 0
        %817 = vmatpush.bf16.msra.mxu0 0
        %818 = vmatpush.bf16.msra.mxu0 0
        %819 = vmatpush.bf16.msra.mxu0 0
        %820 = vmatpush.bf16.msra.mxu0 %v808
        %821 = vmatpush.bf16.msra.mxu0 %v807
        %822 = vmatmul.bf16.gmra.mxu0 %v812
        %v823 = vpop.f32.mrf.mxu0
        %v824 = vadd.f32 %v797, %v823
        %v825 = vpop.f32.mrf.mxu0
        %826 = vdwg.mxu0
        %v827 = vpack.c.bf16 %v788, %v788
        %v828 = vpack.c.bf16 %v824, %v824
        %v830 = vsel %vm639, %v827, 0
        %v833 = vsel %vm639, %v828, 0
        %835 = vmatpush.bf16.xpose.msra.mxu0 0
        %836 = vmatpush.bf16.xpose.msra.mxu0 0
        %837 = vmatpush.bf16.xpose.msra.mxu0 0
        %838 = vmatpush.bf16.xpose.msra.mxu0 0
        %839 = vmatpush.bf16.xpose.msra.mxu0 0
        %840 = vmatpush.bf16.xpose.msra.mxu0 0
        %841 = vmatpush.bf16.xpose.msra.mxu0 0
        %842 = vmatpush.bf16.xpose.msra.mxu0 %v833
        %843 = vmatmul.bf16.gmra.mxu0 %v830
        %v844 = vpop.f32.mrf.mxu0
        %v845 = vadd.f32 0.0, %v844
        %v846 = vpop.f32.mrf.mxu0
        %847 = vdwg.mxu0
        %v848 = vsel %vm639, %v845, -inf
        %849 = vmax.xlane.f32.xlu0 %v848
        %v850 = vpop.xlane.xlu0 %849
        %v851 = vsub.f32 %v845, %v850
        %v852 = vmul.f32 %v851, 1.442695
        %v853 = vpow.pop %v852
        %v854 = vsel %vm639, %v853, 0.0
        %855 = vadd.xlane.f32.xlu0 %v854
        %v856 = vpop.xlane.xlu0 %855
        %v857 = vrcp.pop %v856
        %v858 = vmul.f32 %v853, %v857
        %v859 = vpack.c.bf16 %v858, %v858
        %861 = vrot.lane.b32.xlu0 %v828, 120
        %v862 = vpop.permute.xlu0 %861
        %v864 = vsel %vm639, %v859, 0
        %v867 = vsel %vm677, %v862, 0
        %869 = vmatpush.bf16.msra.mxu0 0
        %870 = vmatpush.bf16.msra.mxu0 0
        %871 = vmatpush.bf16.msra.mxu0 0
        %872 = vmatpush.bf16.msra.mxu0 0
        %873 = vmatpush.bf16.msra.mxu0 0
        %874 = vmatpush.bf16.msra.mxu0 0
        %875 = vmatpush.bf16.msra.mxu0 0
        %876 = vmatpush.bf16.msra.mxu0 %v867
        %877 = vmatmul.bf16.gmra.mxu0 %v864
        %v878 = vpop.f32.mrf.mxu0
        %v879 = vadd.f32 0.0, %v878
        %v880 = vpop.f32.mrf.mxu0
        %881 = vdwg.mxu0
        %v882 = vpack.c.bf16 %v879, %v879
        %v883 = vld [vmem:[%s9] sm:$0xf]
        %v885 = vsel %vm639, %v882, 0
        %v888 = vsel %vm677, %v883, 0
        %890 = vmatpush.bf16.msra.mxu0 0
        %891 = vmatpush.bf16.msra.mxu0 0
        %892 = vmatpush.bf16.msra.mxu0 0
        %893 = vmatpush.bf16.msra.mxu0 0
        %894 = vmatpush.bf16.msra.mxu0 0
        %895 = vmatpush.bf16.msra.mxu0 0
        %896 = vmatpush.bf16.msra.mxu0 0
        %897 = vmatpush.bf16.msra.mxu0 %v888
        %898 = vmatmul.bf16.gmra.mxu0 %v885
        %v899 = vpop.f32.mrf.mxu0
        %v900 = vadd.f32 %v753, %v899
        %v901 = vpop.f32.mrf.mxu0
        %902 = vdwg.mxu0
        %v903 = vld [vmem:[%s12] sm:$0x1]
        %v904 = vld [vmem:[%s13] sm:$0x1]
        %v905 = vsel %vm618, %v900, 0.0
        %906 = vadd.xlane.f32.xlu0 %v905
        %v907 = vpop.xlane.xlu0 %906
        %v908 = vmul.f32 %v907, %v726
        %v909 = vsub.f32 %v900, %v908
        %v910 = vmul.f32 %v909, %v909
        %v911 = vsel %vm618, %v910, 0.0
        %912 = vadd.xlane.f32.xlu0 %v911
        %v913 = vpop.xlane.xlu0 %912
        %v914 = vmul.f32 %v913, %v726
        %v915 = vadd.f32 %v914, 1e-05
        %v916 = vrsqrt.pop %v915
        %v917 = vmul.f32 %v916, %v915
        %v918 = vmul.f32 %v917, %v916
        %v919 = vmul.f32 0.5, %v918
        %v920 = vsub.f32 1.5, %v919
        %v921 = vmul.f32 %v916, %v920
        %vm922 = vweird.f32 %v915
        %vm923 = vweird.f32 %v916
        %vm924 = vmor %vm922, %vm923
        %v925 = vsel %vm924, %v916, %v921
        %v926 = vmul.f32 %v909, %v925
        %v928 = vperm.slane %v903, 0
        %v930 = vmul.f32 %v926, %v928
        %v932 = vperm.slane %v904, 0
        %v934 = vadd.f32 %v930, %v932
        %v935 = vpack.c.bf16 %v934, %v934
        %v936 = vld [vmem:[%s16] sm:$0xf]
        %v937 = vld [vmem:[%s16 + $0x4] sm:$0xf]
        %v938 = vld [vmem:[%s16 + $0x8] sm:$0xf]
        %v939 = vld [vmem:[%s16 + $0xc] sm:$0xf]
        %v944 = vunpack.c.l.b16 %v936
        %v945 = vunpack.c.l.b16 %v937
        %v946 = vunpack.c.l.b16 %v938
        %v947 = vunpack.c.l.b16 %v939
        %v948 = vpack.c.b16 %v945, %v944
        %v949 = vpack.c.b16 %v947, %v946
        %v953 = vsel %vm618, %v935, 0
        %955 = vmatpush.bf16.msra.mxu0 0
        %956 = vmatpush.bf16.msra.mxu0 0
        %957 = vmatpush.bf16.msra.mxu0 0
        %958 = vmatpush.bf16.msra.mxu0 0
        %959 = vmatpush.bf16.msra.mxu0 0
        %960 = vmatpush.bf16.msra.mxu0 0
        %961 = vmatpush.bf16.msra.mxu0 %v949
        %962 = vmatpush.bf16.msra.mxu0 %v948
        %963 = vmatmul.bf16.gmra.mxu0 %v953
        %v964 = vpop.f32.mrf.mxu0
        %v965 = vadd.f32 0.0, %v964
        %v966 = vpop.f32.mrf.mxu0
        %967 = vdwg.mxu0
        %v968 = vmax.f32 %v965, 0.0
        %v969 = vpack.c.bf16 %v968, %v968
        %v970 = vld [vmem:[%s17] sm:$0xf]
        %v971 = vld [vmem:[%s17 + $0x4] sm:$0xf]
        %v972 = vld [vmem:[%s17 + $0x8] sm:$0xf]
        %v973 = vld [vmem:[%s17 + $0xc] sm:$0xf]
        %v974 = vld [vmem:[%s17 + $0x10] sm:$0xf]
        %v975 = vld [vmem:[%s17 + $0x14] sm:$0xf]
        %v976 = vld [vmem:[%s17 + $0x18] sm:$0xf]
        %v977 = vld [vmem:[%s17 + $0x1c] sm:$0xf]
        %v986 = vunpack.c.l.b16 %v970
        %v987 = vunpack.c.l.b16 %v971
        %v988 = vunpack.c.l.b16 %v972
        %v989 = vunpack.c.l.b16 %v973
        %v990 = vunpack.c.l.b16 %v974
        %v991 = vunpack.c.l.b16 %v975
        %v992 = vunpack.c.l.b16 %v976
        %v993 = vunpack.c.l.b16 %v977
        %v994 = vpack.c.b16 %v987, %v986
        %v995 = vpack.c.b16 %v989, %v988
        %v996 = vpack.c.b16 %v991, %v990
        %v997 = vpack.c.b16 %v993, %v992
        %vm1002 = vcmask 523264
        %v1004 = vsel %vm1002, %v969, 0
        %1006 = vmatpush.bf16.msra.mxu0 0
        %1007 = vmatpush.bf16.msra.mxu0 0
        %1008 = vmatpush.bf16.msra.mxu0 0
        %1009 = vmatpush.bf16.msra.mxu0 0
        %1010 = vmatpush.bf16.msra.mxu0 %v997
        %1011 = vmatpush.bf16.msra.mxu0 %v996
        %1012 = vmatpush.bf16.msra.mxu0 %v995
        %1013 = vmatpush.bf16.msra.mxu0 %v994
        %1014 = vmatmul.bf16.gmra.mxu0 %v1004
        %v1015 = vpop.f32.mrf.mxu0
        %v1016 = vadd.f32 %v934, %v1015
        %v1017 = vpop.f32.mrf.mxu0
        %1018 = vdwg.mxu0
        %v1019 = vld [vmem:[%s14] sm:$0x1]
        %v1020 = vld [vmem:[%s15] sm:$0x1]
        %v1021 = vsel %vm618, %v1016, 0.0
        %1022 = vadd.xlane.f32.xlu0 %v1021
        %v1023 = vpop.xlane.xlu0 %1022
        %v1024 = vmul.f32 %v1023, %v726
        %v1025 = vsub.f32 %v1016, %v1024
        %v1026 = vmul.f32 %v1025, %v1025
        %v1027 = vsel %vm618, %v1026, 0.0
        %1028 = vadd.xlane.f32.xlu0 %v1027
        %v1029 = vpop.xlane.xlu0 %1028
        %v1030 = vmul.f32 %v1029, %v726
        %v1031 = vadd.f32 %v1030, 1e-05
        %v1032 = vrsqrt.pop %v1031
        %v1033 = vmul.f32 %v1032, %v1031
        %v1034 = vmul.f32 %v1033, %v1032
        %v1035 = vmul.f32 0.5, %v1034
        %v1036 = vsub.f32 1.5, %v1035
        %v1037 = vmul.f32 %v1032, %v1036
        %vm1038 = vweird.f32 %v1031
        %vm1039 = vweird.f32 %v1032
        %vm1040 = vmor %vm1038, %vm1039
        %v1041 = vsel %vm1040, %v1032, %v1037
        %v1042 = vmul.f32 %v1025, %v1041
        %v1044 = vperm.slane %v1019, 0
        %v1046 = vmul.f32 %v1042, %v1044
        %v1048 = vperm.slane %v1020, 0
        %v1050 = vadd.f32 %v1046, %v1048
        %1051 = vst.msk [vmem:[%s579] sm:$0xff] %vm618, %v1050
        %s1052 = sand.u32 %s428, 1
        %s1053 = scalar_lea.sflag [#allocation3], %s1052
        %s1054 = sand.u32 %s428, 1
        %s1055 = smul.addr %s1054, 8
        %s1056 = scalar_lea.vmem [#allocation2], %s1055
        // Predicated region
        $region93: #{tpu_custom_call.1} parent=91 // pred_check
          %p1057 = pneg %p438
        $region94: #{tpu_custom_call.1} parent=91 // pred_check_branch
          %1059 = sbr.rel (%p1057) target = $region96
        $region95: #{tpu_custom_call.1} parent=91 // pred_region
          %1061 = vsyncadd %s1053, 0
          %s1062 = smul.addr %s32, 8
          %s1063 = scalar_lea.hbm %s18, %s1062
          %s1065 = sshll.u32 %s1056, 4
          %s1066 = int_to_ptr.vmem [resolvable:$true] %s1065
          %s1067 = sshll.u32 %s1063, 4
          %s1068 = int_to_ptr.hbm [resolvable:$true] %s1067
          %1070 = dma.vmem_to_hbm [thread:$0]  %s1066, 128, %s1068, %s1053
        $region96: #{tpu_custom_call.1} parent=91 // pred_fallthru
          _
      $region92: #{tpu_custom_call.1} parent=5 // pred_fallthru
        _
      %p1071 = scmp.le.s32.totalorder 2, %s27
      // Predicated region
      $region97: #{tpu_custom_call.1} parent=5 // pred_check
        %p1072 = pneg %p1071
      $region98: #{tpu_custom_call.1} parent=5 // pred_check_branch
        %1074 = sbr.rel (%p1072) target = $region100
      $region99: #{tpu_custom_call.1} parent=5 // pred_region
        %s1075 = ssub.s32 %s27, 2
        // Predicated region
        $region101: #{tpu_custom_call.1} parent=99 // pred_check
          %p1076 = pneg %p444
        $region102: #{tpu_custom_call.1} parent=99 // pred_check_branch
          %1078 = sbr.rel (%p1076) target = $region104
        $region103: #{tpu_custom_call.1} parent=99 // pred_region
          %s1079 = sand.u32 %s429, 1
          %s1080 = scalar_lea.sflag [#allocation3], %s1079
          %s1081 = sand.u32 %s429, 1
          %s1082 = smul.addr %s1081, 8
          %s1083 = scalar_lea.vmem [#allocation2], %s1082
          %1085 = dma.done %s1080, 128
        $region104: #{tpu_custom_call.1} parent=99 // pred_fallthru
          _
      $region100: #{tpu_custom_call.1} parent=5 // pred_fallthru
        _
    $region6: #{tpu_custom_call.1} parent=1 // loop_footer
      %s31 = sadd.s32 1, %s27
    $region7: #{tpu_custom_call.1} parent=1 // loop_footer_branch
      %26 = sbr.rel target = $region3
    $region8: #{tpu_custom_call.1} parent=1 // loop_exit
      _
    %1086 = vsyncpa [#allocation3], 1
    %s1087 = scalar_lea.sflag [#allocation3], 1
    %1088 = vsyncpa %s1087, 1

</llo_original>
